<compile_context>
chip_gen: v7x
topology: tpu7x:2x2x1
jax: 0.10.0
libtpu: 0.0.40
codegen_flags: <defaults>
</compile_context>

<pallas_src>
import jax
import jax.numpy as jnp
from jax import lax
from jax.experimental import pallas as pl
from jax.experimental.pallas import tpu as pltpu

H = W = 8
CIN = 2                        # input_channels
C1 = 16                        # conv1 out channels
C2 = 16 * CIN                  # conv2 out channels = 32
C3 = 32                        # conv3 out channels
ACTIONS = 4
IN_FLAT = H * W * CIN          # 128 (CHW-flattened NCHW input)
H1 = W1 = 6
H2 = W2 = 4
H3 = W3 = 2
F1 = H1 * W1 * C1              # 576
F1P = 640                      # F1 zero-padded to a multiple of 128 lanes
F2 = H2 * W2 * C2              # 512
F3 = H3 * W3 * C3              # 128
FEAT = F3
HEADP = 128                    # head output zero-padded to a full lane group
BN_EPS = 1e-5


# ---------------------------------------------------------------------------
# Kernel: 4 lane-dense matmuls + f32 bias/relu epilogues, lane-dense store.
# ---------------------------------------------------------------------------
def dqn_kernel(x_ref,
               t1_ref, b1_ref,
               t2_ref, b2_ref,
               t3_ref, b3_ref,
               wh_ref, bh_ref,
               out_ref):
    x = x_ref[...]                                             # (TB, 128) bf16
    y = jnp.dot(x, t1_ref[...], preferred_element_type=jnp.float32)
    y = jnp.maximum(y + b1_ref[...], 0.0)                      # (TB, 640) f32
    y = jnp.dot(y.astype(jnp.bfloat16), t2_ref[...],
                preferred_element_type=jnp.float32)
    y = jnp.maximum(y + b2_ref[...], 0.0)                      # (TB, 512) f32
    y = jnp.dot(y.astype(jnp.bfloat16), t3_ref[...],
                preferred_element_type=jnp.float32)
    y = jnp.maximum(y + b3_ref[...], 0.0)                      # (TB, 128) f32
    q = jnp.dot(y.astype(jnp.bfloat16), wh_ref[...],
                preferred_element_type=jnp.float32)
    out_ref[...] = q + bh_ref[...]                             # (TB, 128) f32


# ---------------------------------------------------------------------------
# Parameters (PyTorch-style layouts) and one-time preparation.
# ---------------------------------------------------------------------------
def init_params(key):
    ks = jax.random.split(key, 24)
    p = {}
    # conv weights in PyTorch OIHW layout, biases per out-channel.
    p["w1"] = 0.1 * jax.random.normal(ks[0], (C1, CIN, 3, 3), jnp.float32)
    p["cb1"] = 0.05 * jax.random.normal(ks[1], (C1,), jnp.float32)
    p["w2"] = 0.1 * jax.random.normal(ks[2], (C2, C1, 3, 3), jnp.float32)
    p["cb2"] = 0.05 * jax.random.normal(ks[3], (C2,), jnp.float32)
    p["w3"] = 0.1 * jax.random.normal(ks[4], (C3, C2, 3, 3), jnp.float32)
    p["cb3"] = 0.05 * jax.random.normal(ks[5], (C3,), jnp.float32)
    # BatchNorm params (eval-mode running stats).
    k = 6
    for i, c in ((1, C1), (2, C2), (3, C3)):
        p[f"g{i}"] = 1.0 + 0.1 * jax.random.normal(ks[k], (c,), jnp.float32)
        p[f"be{i}"] = 0.1 * jax.random.normal(ks[k + 1], (c,), jnp.float32)
        p[f"mu{i}"] = 0.1 * jax.random.normal(ks[k + 2], (c,), jnp.float32)
        p[f"var{i}"] = 1.0 + 0.1 * jax.random.uniform(ks[k + 3], (c,),
                                                      jnp.float32)
        k += 4
    # head: PyTorch nn.Linear weight (out, in) with `in` in C*H*W order.
    p["wh_pt"] = 0.1 * jax.random.normal(ks[k], (ACTIONS, FEAT), jnp.float32)
    p["bh"] = 0.05 * jnp.arange(ACTIONS, dtype=jnp.float32)
    return p


def prepare_params(p):
    """One-time weight prep (hoisted out of the forward path).

    - Fold conv bias + eval-mode BN into (scaled conv weight, per-channel bias).
    - Lower each (linear) conv to a dense Toeplitz matrix via a one-hot basis.
      conv1 consumes the CHW-flattened NCHW input; later layers consume
      HWC-flattened activations.
    - Zero-pad F1 576->640 (t1 cols, b1, t2 rows) and the head to 128 output
      lanes so every kernel tile is lane-dense.
    - Permute the PyTorch head weight from CHW- to HWC-flatten order.
    - Cast matmul operands to bf16 (f32 accumulation in-kernel).
    """
    hi = lax.Precision.HIGHEST

    def fold(w_oihw, cb, g, be, mu, var):
        scale = g / jnp.sqrt(var + BN_EPS)
        w_hwio = jnp.transpose(w_oihw, (2, 3, 1, 0)) * scale   # scale on O
        bias = (cb - mu) * scale + be
        return w_hwio, bias

    w1, bias1 = fold(p["w1"], p["cb1"], p["g1"], p["be1"], p["mu1"], p["var1"])
    w2, bias2 = fold(p["w2"], p["cb2"], p["g2"], p["be2"], p["mu2"], p["var2"])
    w3, bias3 = fold(p["w3"], p["cb3"], p["g3"], p["be3"], p["mu3"], p["var3"])

    # conv1 Toeplitz: basis is one-hot over the CHW-flattened input.
    dn1 = ("NCHW", "HWIO", "NHWC")
    eye = jnp.eye(IN_FLAT, dtype=jnp.float32).reshape(IN_FLAT, CIN, H, W)
    t1 = lax.conv_general_dilated(eye, w1, (1, 1), "VALID",
                                  dimension_numbers=dn1,
                                  precision=hi).reshape(IN_FLAT, F1)

    dn = ("NHWC", "HWIO", "NHWC")
    eye = jnp.eye(F1, dtype=jnp.float32).reshape(F1, H1, W1, C1)
    t2 = lax.conv_general_dilated(eye, w2, (1, 1), "VALID",
                                  dimension_numbers=dn,
                                  precision=hi).reshape(F1, F2)

    eye = jnp.eye(F2, dtype=jnp.float32).reshape(F2, H2, W2, C2)
    t3 = lax.conv_general_dilated(eye, w3, (1, 1), "VALID",
                                  dimension_numbers=dn,
                                  precision=hi).reshape(F2, F3)

    # Per-feature biases (HWC flatten: channel varies fastest).
    b1 = jnp.tile(bias1, H1 * W1).reshape(1, F1).astype(jnp.float32)
    b2 = jnp.tile(bias2, H2 * W2).reshape(1, F2).astype(jnp.float32)
    b3 = jnp.tile(bias3, H3 * W3).reshape(1, F3).astype(jnp.float32)

    # Head weight: PyTorch flattens CHW; kernel features are HWC-flattened.
    wh = (p["wh_pt"].reshape(ACTIONS, C3, H3, W3)
          .transpose(0, 2, 3, 1)
          .reshape(ACTIONS, FEAT)
          .T)                                                  # (FEAT, ACTIONS)
    bh = p["bh"].reshape(1, ACTIONS).astype(jnp.float32)

    # Lane-dense zero padding: F1 576->640, head 4->128 output lanes.
    t1p = jnp.zeros((IN_FLAT, F1P), jnp.float32).at[:, :F1].set(t1)
    b1p = jnp.zeros((1, F1P), jnp.float32).at[:, :F1].set(b1)
    t2p = jnp.zeros((F1P, F2), jnp.float32).at[:F1, :].set(t2)
    whp = jnp.zeros((FEAT, HEADP), jnp.float32).at[:, :ACTIONS].set(wh)
    bhp = jnp.zeros((1, HEADP), jnp.float32).at[:, :ACTIONS].set(bh)

    return (t1p.astype(jnp.bfloat16), b1p,
            t2p.astype(jnp.bfloat16), b2,
            t3.astype(jnp.bfloat16), b3,
            whp.astype(jnp.bfloat16), bhp)


# ---------------------------------------------------------------------------
# Batch tiling policy (perf review items 1, 2, 9).
# ---------------------------------------------------------------------------
def _pick_tile(n):
    """Adaptive batch tile.

    - Small batches: smallest 32-aligned tile covering n (low-latency path,
      avoids ~128x padded MXU work at batch 1-32).
    - Large batches: TB=512 (review sweep range), capped at ceil(n/2) rounded
      up to 256 so the parallel grid keeps >=2 tiles for v7x's 2 TensorCores.
    """
    if n <= 256:
        return max(32, ((n + 31) // 32) * 32)
    half = ((n + 1) // 2 + 255) // 256 * 256
    return min(512, half)


# ---------------------------------------------------------------------------
# Forward pass (expects already-prepared weights).
# ---------------------------------------------------------------------------
def dqn_forward(x_nchw, prep):
    t1, b1, t2, b2, t3, b3, wh, bh = prep
    n = x_nchw.shape[0]
    x = x_nchw.reshape(n, IN_FLAT).astype(jnp.bfloat16)   # CHW flatten, bf16
    tb = _pick_tile(n)
    pn = pl.cdiv(n, tb) * tb
    if pn != n:
        x = jnp.pad(x, ((0, pn - n), (0, 0)))

    out = pl.pallas_call(
        dqn_kernel,
        out_shape=jax.ShapeDtypeStruct((pn, HEADP), jnp.float32),
        grid=(pn // tb,),
        in_specs=[
            pl.BlockSpec((tb, IN_FLAT), lambda i: (i, 0)),      # x (tiled)
            # Weights/biases: constant index_map -> VMEM-resident, DMA'd once.
            pl.BlockSpec((IN_FLAT, F1P), lambda i: (0, 0)),
            pl.BlockSpec((1, F1P), lambda i: (0, 0)),
            pl.BlockSpec((F1P, F2), lambda i: (0, 0)),
            pl.BlockSpec((1, F2), lambda i: (0, 0)),
            pl.BlockSpec((F2, F3), lambda i: (0, 0)),
            pl.BlockSpec((1, F3), lambda i: (0, 0)),
            pl.BlockSpec((F3, HEADP), lambda i: (0, 0)),
            pl.BlockSpec((1, HEADP), lambda i: (0, 0)),
        ],
        out_specs=pl.BlockSpec((tb, HEADP), lambda i: (i, 0)),
        compiler_params=pltpu.CompilerParams(
            dimension_semantics=("parallel",)),
    )(x, t1, b1, t2, b2, t3, b3, wh, bh)
    return out[:n, :ACTIONS]


# ---------------------------------------------------------------------------
# References.
# ---------------------------------------------------------------------------
def dqn_reference_dense(x_nchw, prep):
    """Dense matmul reference with the same bf16/f32 mixed precision as the
    kernel (checks the Pallas lowering itself at tight tolerance)."""
    t1, b1, t2, b2, t3, b3, wh, bh = prep
    x = x_nchw.reshape(x_nchw.shape[0], IN_FLAT).astype(jnp.bfloat16)
    y = jnp.maximum(jnp.dot(x, t1, preferred_element_type=jnp.float32) + b1, 0.0)
    y = jnp.maximum(jnp.dot(y.astype(jnp.bfloat16), t2,
                            preferred_element_type=jnp.float32) + b2, 0.0)
    y = jnp.maximum(jnp.dot(y.astype(jnp.bfloat16), t3,
                            preferred_element_type=jnp.float32) + b3, 0.0)
    q = jnp.dot(y.astype(jnp.bfloat16), wh,
                preferred_element_type=jnp.float32) + bh
    return q[:, :ACTIONS]


def dqn_reference_conv(x_nchw, p):
    """Pure f32 lax.conv reference with PyTorch-module (eval) semantics."""
    hi = lax.Precision.HIGHEST
    dn = ("NHWC", "HWIO", "NHWC")
    x = jnp.transpose(x_nchw, (0, 2, 3, 1)).astype(jnp.float32)

    def layer(x, w_oihw, cb, g, be, mu, var):
        w = jnp.transpose(w_oihw, (2, 3, 1, 0))
        scale = g / jnp.sqrt(var + BN_EPS)
        bias = (cb - mu) * scale + be
        y = lax.conv_general_dilated(x, w, (1, 1), "VALID",
                                     dimension_numbers=dn, precision=hi)
        return jnp.maximum(y * scale + bias, 0.0)

    y = layer(x, p["w1"], p["cb1"], p["g1"], p["be1"], p["mu1"], p["var1"])
    y = layer(y, p["w2"], p["cb2"], p["g2"], p["be2"], p["mu2"], p["var2"])
    y = layer(y, p["w3"], p["cb3"], p["g3"], p["be3"], p["mu3"], p["var3"])
    n = x.shape[0]
    feat_chw = jnp.transpose(y, (0, 3, 1, 2)).reshape(n, FEAT)  # CHW flatten
    return jnp.dot(feat_chw, p["wh_pt"].T, precision=hi) + p["bh"]


if __name__ == "__main__":
    key = jax.random.PRNGKey(0)
    pkey, xkey, xkey2 = jax.random.split(key, 3)
    params = init_params(pkey)
    prep = prepare_params(params)          # one-time weight prep (hoisted)

    # Small-batch path: batch=2, NCHW like PyTorch (N, 2, 8, 8).
    x = jax.random.normal(xkey, (2, CIN, H, W), jnp.float32)
    q = jax.block_until_ready(dqn_forward(x, prep))
    assert q.shape == (2, ACTIONS)
    assert jnp.allclose(q, dqn_reference_dense(x, prep), atol=1e-3, rtol=1e-3)
    assert jnp.allclose(q, dqn_reference_conv(x, params), atol=2e-2, rtol=2e-2)

    # Multi-tile path: batch=384 -> TB=256, 2-tile parallel grid.
    xb = jax.random.normal(xkey2, (384, CIN, H, W), jnp.float32)
    qb = jax.block_until_ready(dqn_forward(xb, prep))
    assert qb.shape == (384, ACTIONS)
    assert jnp.allclose(qb, dqn_reference_dense(xb, prep), atol=1e-3, rtol=1e-3)
    assert jnp.allclose(qb, dqn_reference_conv(xb, params), atol=2e-2, rtol=2e-2)

    print("KERNEL_OK")
</pallas_src>

<mosaic_0001>
module attributes {stable_mosaic.version = 11 : i64} {
  func.func @dqn_kernel(%arg0: i32, %arg1: memref<32x128xbf16, #tpu.memory_space<vmem>>, %arg2: memref<128x640xbf16, #tpu.memory_space<vmem>>, %arg3: memref<1x640xf32, #tpu.memory_space<vmem>>, %arg4: memref<640x512xbf16, #tpu.memory_space<vmem>>, %arg5: memref<1x512xf32, #tpu.memory_space<vmem>>, %arg6: memref<512x128xbf16, #tpu.memory_space<vmem>>, %arg7: memref<1x128xf32, #tpu.memory_space<vmem>>, %arg8: memref<128x128xbf16, #tpu.memory_space<vmem>>, %arg9: memref<1x128xf32, #tpu.memory_space<vmem>>, %arg10: memref<32x128xf32, #tpu.memory_space<vmem>>) attributes {dimension_semantics = [#tpu.dimension_semantics<parallel>], iteration_bounds = array<i64: 1>, scalar_prefetch = 0 : i64, scratch_operands = 0 : i64, tpu.core_type = #tpu.core_type<tc>, window_params = [{transform_indices = @transform_0, window_bounds = array<i64: 32, 128>}, {pipeline_mode = #tpu.pipeline_mode<synchronous>, transform_indices = @transform_1, window_bounds = array<i64: 128, 640>}, {pipeline_mode = #tpu.pipeline_mode<synchronous>, transform_indices = @transform_2, window_bounds = array<i64: 1, 640>}, {pipeline_mode = #tpu.pipeline_mode<synchronous>, transform_indices = @transform_3, window_bounds = array<i64: 640, 512>}, {pipeline_mode = #tpu.pipeline_mode<synchronous>, transform_indices = @transform_4, window_bounds = array<i64: 1, 512>}, {pipeline_mode = #tpu.pipeline_mode<synchronous>, transform_indices = @transform_5, window_bounds = array<i64: 512, 128>}, {pipeline_mode = #tpu.pipeline_mode<synchronous>, transform_indices = @transform_6, window_bounds = array<i64: 1, 128>}, {pipeline_mode = #tpu.pipeline_mode<synchronous>, transform_indices = @transform_7, window_bounds = array<i64: 128, 128>}, {pipeline_mode = #tpu.pipeline_mode<synchronous>, transform_indices = @transform_8, window_bounds = array<i64: 1, 128>}, {transform_indices = @transform_9, window_bounds = array<i64: 32, 128>}]} {
    %c0 = arith.constant 0 : index
    %c0_0 = arith.constant 0 : index
    %0 = vector.load %arg1[%c0, %c0_0] : memref<32x128xbf16, #tpu.memory_space<vmem>>, vector<32x128xbf16>
    %c0_1 = arith.constant 0 : index
    %c0_2 = arith.constant 0 : index
    %1 = vector.load %arg2[%c0_1, %c0_2] : memref<128x640xbf16, #tpu.memory_space<vmem>>, vector<128x640xbf16>
    %cst = arith.constant dense<0.000000e+00> : vector<32x640xf32>
    %2 = tpu.matmul %0, %1, %cst {dimension_numbers = #tpu.dot_dimension_numbers<[1], [0], [0], [1], [0, 0, 1, 1], [], []>} : vector<32x128xbf16>, vector<128x640xbf16>, vector<32x640xf32> -> vector<32x640xf32>
    %c0_3 = arith.constant 0 : index
    %c0_4 = arith.constant 0 : index
    %3 = vector.load %arg3[%c0_3, %c0_4] : memref<1x640xf32, #tpu.memory_space<vmem>>, vector<1x640xf32>
    %4 = vector.broadcast %3 : vector<1x640xf32> to vector<32x640xf32>
    %5 = arith.addf %2, %4 : vector<32x640xf32>
    %cst_5 = arith.constant 0.000000e+00 : f32
    %6 = vector.broadcast %cst_5 : f32 to vector<32x640xf32>
    %7 = arith.maximumf %5, %6 : vector<32x640xf32>
    %8 = arith.truncf %7 : vector<32x640xf32> to vector<32x640xbf16>
    %c0_6 = arith.constant 0 : index
    %c0_7 = arith.constant 0 : index
    %9 = vector.load %arg4[%c0_6, %c0_7] : memref<640x512xbf16, #tpu.memory_space<vmem>>, vector<640x512xbf16>
    %cst_8 = arith.constant dense<0.000000e+00> : vector<32x512xf32>
    %10 = tpu.matmul %8, %9, %cst_8 {dimension_numbers = #tpu.dot_dimension_numbers<[1], [0], [0], [1], [0, 0, 1, 1], [], []>} : vector<32x640xbf16>, vector<640x512xbf16>, vector<32x512xf32> -> vector<32x512xf32>
    %c0_9 = arith.constant 0 : index
    %c0_10 = arith.constant 0 : index
    %11 = vector.load %arg5[%c0_9, %c0_10] : memref<1x512xf32, #tpu.memory_space<vmem>>, vector<1x512xf32>
    %12 = vector.broadcast %11 : vector<1x512xf32> to vector<32x512xf32>
    %13 = arith.addf %10, %12 : vector<32x512xf32>
    %cst_11 = arith.constant 0.000000e+00 : f32
    %14 = vector.broadcast %cst_11 : f32 to vector<32x512xf32>
    %15 = arith.maximumf %13, %14 : vector<32x512xf32>
    %16 = arith.truncf %15 : vector<32x512xf32> to vector<32x512xbf16>
    %c0_12 = arith.constant 0 : index
    %c0_13 = arith.constant 0 : index
    %17 = vector.load %arg6[%c0_12, %c0_13] : memref<512x128xbf16, #tpu.memory_space<vmem>>, vector<512x128xbf16>
    %cst_14 = arith.constant dense<0.000000e+00> : vector<32x128xf32>
    %18 = tpu.matmul %16, %17, %cst_14 {dimension_numbers = #tpu.dot_dimension_numbers<[1], [0], [0], [1], [0, 0, 1, 1], [], []>} : vector<32x512xbf16>, vector<512x128xbf16>, vector<32x128xf32> -> vector<32x128xf32>
    %c0_15 = arith.constant 0 : index
    %c0_16 = arith.constant 0 : index
    %19 = vector.load %arg7[%c0_15, %c0_16] : memref<1x128xf32, #tpu.memory_space<vmem>>, vector<1x128xf32>
    %20 = vector.broadcast %19 : vector<1x128xf32> to vector<32x128xf32>
    %21 = arith.addf %18, %20 : vector<32x128xf32>
    %cst_17 = arith.constant 0.000000e+00 : f32
    %22 = vector.broadcast %cst_17 : f32 to vector<32x128xf32>
    %23 = arith.maximumf %21, %22 : vector<32x128xf32>
    %24 = arith.truncf %23 : vector<32x128xf32> to vector<32x128xbf16>
    %c0_18 = arith.constant 0 : index
    %c0_19 = arith.constant 0 : index
    %25 = vector.load %arg8[%c0_18, %c0_19] : memref<128x128xbf16, #tpu.memory_space<vmem>>, vector<128x128xbf16>
    %cst_20 = arith.constant dense<0.000000e+00> : vector<32x128xf32>
    %26 = tpu.matmul %24, %25, %cst_20 {dimension_numbers = #tpu.dot_dimension_numbers<[1], [0], [0], [1], [0, 0, 1, 1], [], []>} : vector<32x128xbf16>, vector<128x128xbf16>, vector<32x128xf32> -> vector<32x128xf32>
    %c0_21 = arith.constant 0 : index
    %c0_22 = arith.constant 0 : index
    %27 = vector.load %arg9[%c0_21, %c0_22] : memref<1x128xf32, #tpu.memory_space<vmem>>, vector<1x128xf32>
    %28 = vector.broadcast %27 : vector<1x128xf32> to vector<32x128xf32>
    %29 = arith.addf %26, %28 : vector<32x128xf32>
    %c0_23 = arith.constant 0 : index
    %c0_24 = arith.constant 0 : index
    %30 = vector.load %arg10[%c0_23, %c0_24] : memref<32x128xf32, #tpu.memory_space<vmem>>, vector<32x128xf32>
    tpu.vector_store %arg10[%c0_23, %c0_24], %29 {strides = array<i32>} : memref<32x128xf32, #tpu.memory_space<vmem>>, vector<32x128xf32>,
    return
  }
  func.func @transform_0(%arg0: i32) -> (i32, i32) {
    %c0_i32 = arith.constant 0 : i32
    %c0_i32_0 = arith.constant 0 : i32
    return %arg0, %c0_i32 : i32, i32
  }
  func.func @transform_1(%arg0: i32) -> (i32, i32) {
    %c0_i32 = arith.constant 0 : i32
    %c0_i32_0 = arith.constant 0 : i32
    %c0_i32_1 = arith.constant 0 : i32
    return %c0_i32, %c0_i32_0 : i32, i32
  }
  func.func @transform_2(%arg0: i32) -> (i32, i32) {
    %c0_i32 = arith.constant 0 : i32
    %c0_i32_0 = arith.constant 0 : i32
    %c0_i32_1 = arith.constant 0 : i32
    return %c0_i32, %c0_i32_0 : i32, i32
  }
  func.func @transform_3(%arg0: i32) -> (i32, i32) {
    %c0_i32 = arith.constant 0 : i32
    %c0_i32_0 = arith.constant 0 : i32
    %c0_i32_1 = arith.constant 0 : i32
    return %c0_i32, %c0_i32_0 : i32, i32
  }
  func.func @transform_4(%arg0: i32) -> (i32, i32) {
    %c0_i32 = arith.constant 0 : i32
    %c0_i32_0 = arith.constant 0 : i32
    %c0_i32_1 = arith.constant 0 : i32
    return %c0_i32, %c0_i32_0 : i32, i32
  }
  func.func @transform_5(%arg0: i32) -> (i32, i32) {
    %c0_i32 = arith.constant 0 : i32
    %c0_i32_0 = arith.constant 0 : i32
    %c0_i32_1 = arith.constant 0 : i32
    return %c0_i32, %c0_i32_0 : i32, i32
  }
  func.func @transform_6(%arg0: i32) -> (i32, i32) {
    %c0_i32 = arith.constant 0 : i32
    %c0_i32_0 = arith.constant 0 : i32
    %c0_i32_1 = arith.constant 0 : i32
    return %c0_i32, %c0_i32_0 : i32, i32
  }
  func.func @transform_7(%arg0: i32) -> (i32, i32) {
    %c0_i32 = arith.constant 0 : i32
    %c0_i32_0 = arith.constant 0 : i32
    %c0_i32_1 = arith.constant 0 : i32
    return %c0_i32, %c0_i32_0 : i32, i32
  }
  func.func @transform_8(%arg0: i32) -> (i32, i32) {
    %c0_i32 = arith.constant 0 : i32
    %c0_i32_0 = arith.constant 0 : i32
    %c0_i32_1 = arith.constant 0 : i32
    return %c0_i32, %c0_i32_0 : i32, i32
  }
  func.func @transform_9(%arg0: i32) -> (i32, i32) {
    %c0_i32 = arith.constant 0 : i32
    %c0_i32_0 = arith.constant 0 : i32
    return %arg0, %c0_i32 : i32, i32
  }
}

</mosaic_0001>

<llo_original>
// kernel: tpu_custom_call.1
$region0: #{tpu_custom_call.1}
  #allocation0 [shape = 'u32[]', space=smem, size = 0x4, offset = 0x4, fixed_abs, tag = 'smem constant byte address 0x4 - core index']
  #allocation1 [shape = 'u32[144,128]{1,0:T(1,128)}', space=vmem, size = 0x12000, scoped, tag = 'internal scratch']
  %s0 = inlined_call_operand.hbm [shape: bf16[32,128], index: 0, kind: input, shape index: {}]
  %s1 = inlined_call_operand.hbm [shape: bf16[128,640], index: 1, kind: input, shape index: {}]
  %s2 = inlined_call_operand.vmem [shape: f32[1,640], index: 2, kind: input, shape index: {}]
  %s3 = inlined_call_operand.hbm [shape: bf16[640,512], index: 3, kind: input, shape index: {}]
  %s4 = inlined_call_operand.vmem [shape: f32[1,512], index: 4, kind: input, shape index: {}]
  %s5 = inlined_call_operand.hbm [shape: bf16[512,128], index: 5, kind: input, shape index: {}]
  %s6 = inlined_call_operand.vmem [shape: f32[1,128], index: 6, kind: input, shape index: {}]
  %s7 = inlined_call_operand.hbm [shape: bf16[128,128], index: 7, kind: input, shape index: {}]
  %s8 = inlined_call_operand.vmem [shape: f32[1,128], index: 8, kind: input, shape index: {}]
  %s9 = inlined_call_operand.hbm [shape: f32[32,128], index: 9, kind: output, shape index: {}]
  %s10 = sld [smem:[#allocation0]]
  $region66: #{tpu_custom_call.1} parent=0
    _
  %s12 = ssub.s32 1, %s10
  %s13 = scalar_select 0, %s12, %s10
  $region1: #{tpu_custom_call.1} parent=0
    #allocation2 [shape = 'u8[8192]{0}', space=vmem, size = 0x2000, scoped, tag = 'input window, operand 0, single buffered']
    #allocation3 [shape = 's32[1]{0}', space=sflag, size = 0x4, scoped, tag = 'scoped memory for tpu_custom_call.1']
    #allocation4 [shape = 's32[1]{0}', space=sflag, size = 0x4, scoped, tag = 'scoped memory for tpu_custom_call.1']
    #allocation5 [shape = 'u8[163840]{0}', space=vmem, size = 0x28000, scoped, tag = 'input window, operand 1, single buffered']
    #allocation6 [shape = 's32[1]{0}', space=sflag, size = 0x4, scoped, tag = 'scoped memory for tpu_custom_call.1']
    #allocation7 [shape = 'u8[655360]{0}', space=vmem, size = 0xa0000, scoped, tag = 'input window, operand 3, single buffered']
    #allocation8 [shape = 'u8[131072]{0}', space=vmem, size = 0x20000, scoped, tag = 'input window, operand 5, single buffered']
    #allocation9 [shape = 's32[1]{0}', space=sflag, size = 0x4, scoped, tag = 'scoped memory for tpu_custom_call.1']
    #allocation10 [shape = 'u8[32768]{0}', space=vmem, size = 0x8000, scoped, tag = 'input window, operand 7, single buffered']
    #allocation11 [shape = 'u8[16384]{0}', space=vmem, size = 0x4000, scoped, tag = 'output window, operand 0, single buffered']
    %14 = vsyncpa [#allocation3], 0
    %15 = vsyncpa [#allocation6], 0
    %16 = vsyncpa [#allocation9], 0
    %17 = vsyncpa [#allocation4], 0
    // Predicated region
    $region2: #{tpu_custom_call.1} parent=1 // pred_check
      _
    $region3: #{tpu_custom_call.1} parent=1 // pred_check_branch
      %19 = sbr.rel (0) target = $region5
    $region4: #{tpu_custom_call.1} parent=1 // pred_region
      %s21 = ssub.s32 256, 256
      %22 = vsyncadd [#allocation3], %s21
      %s23 = sshll.u32 [#allocation2], 4
      %s24 = int_to_ptr.vmem [resolvable:$true] %s23
      %29 = dma.hbm_to_vmem [thread:$0]  %s0, 256, %s24, [#allocation3], 64, 64, 4
    $region5: #{tpu_custom_call.1} parent=1 // pred_fallthru
      _
    // Predicated region
    $region6: #{tpu_custom_call.1} parent=1 // pred_check
      _
    $region7: #{tpu_custom_call.1} parent=1 // pred_check_branch
      %31 = sbr.rel (0) target = $region9
    $region8: #{tpu_custom_call.1} parent=1 // pred_region
      %s33 = ssub.s32 5120, 5120
      %34 = vsyncadd [#allocation6], %s33
      %s35 = sshll.u32 [#allocation5], 4
      %s36 = int_to_ptr.vmem [resolvable:$true] %s35
      %41 = dma.hbm_to_vmem [thread:$0]  %s1, 5120, %s36, [#allocation6], 320, 320, 20
    $region9: #{tpu_custom_call.1} parent=1 // pred_fallthru
      _
    // Predicated region
    $region10: #{tpu_custom_call.1} parent=1 // pred_check
      _
    $region11: #{tpu_custom_call.1} parent=1 // pred_check_branch
      %43 = sbr.rel (0) target = $region13
    $region12: #{tpu_custom_call.1} parent=1 // pred_region
      _
    $region13: #{tpu_custom_call.1} parent=1 // pred_fallthru
      _
    // Predicated region
    $region14: #{tpu_custom_call.1} parent=1 // pred_check
      _
    $region15: #{tpu_custom_call.1} parent=1 // pred_check_branch
      %45 = sbr.rel (0) target = $region17
    $region16: #{tpu_custom_call.1} parent=1 // pred_region
      %s47 = ssub.s32 20480, 20480
      %48 = vsyncadd [#allocation6], %s47
      %s49 = sshll.u32 [#allocation7], 4
      %s50 = int_to_ptr.vmem [resolvable:$true] %s49
      %55 = dma.hbm_to_vmem [thread:$0]  %s3, 20480, %s50, [#allocation6], 256, 256, 16
    $region17: #{tpu_custom_call.1} parent=1 // pred_fallthru
      _
    // Predicated region
    $region18: #{tpu_custom_call.1} parent=1 // pred_check
      _
    $region19: #{tpu_custom_call.1} parent=1 // pred_check_branch
      %57 = sbr.rel (0) target = $region21
    $region20: #{tpu_custom_call.1} parent=1 // pred_region
      _
    $region21: #{tpu_custom_call.1} parent=1 // pred_fallthru
      _
    // Predicated region
    $region22: #{tpu_custom_call.1} parent=1 // pred_check
      _
    $region23: #{tpu_custom_call.1} parent=1 // pred_check_branch
      %59 = sbr.rel (0) target = $region25
    $region24: #{tpu_custom_call.1} parent=1 // pred_region
      %s61 = ssub.s32 4096, 4096
      %62 = vsyncadd [#allocation9], %s61
      %s63 = sshll.u32 [#allocation8], 4
      %s64 = int_to_ptr.vmem [resolvable:$true] %s63
      %69 = dma.hbm_to_vmem [thread:$0]  %s5, 4096, %s64, [#allocation9], 64, 64, 4
    $region25: #{tpu_custom_call.1} parent=1 // pred_fallthru
      _
    // Predicated region
    $region26: #{tpu_custom_call.1} parent=1 // pred_check
      _
    $region27: #{tpu_custom_call.1} parent=1 // pred_check_branch
      %71 = sbr.rel (0) target = $region29
    $region28: #{tpu_custom_call.1} parent=1 // pred_region
      _
    $region29: #{tpu_custom_call.1} parent=1 // pred_fallthru
      _
    // Predicated region
    $region30: #{tpu_custom_call.1} parent=1 // pred_check
      _
    $region31: #{tpu_custom_call.1} parent=1 // pred_check_branch
      %73 = sbr.rel (0) target = $region33
    $region32: #{tpu_custom_call.1} parent=1 // pred_region
      %s75 = ssub.s32 1024, 1024
      %76 = vsyncadd [#allocation9], %s75
      %s77 = sshll.u32 [#allocation10], 4
      %s78 = int_to_ptr.vmem [resolvable:$true] %s77
      %83 = dma.hbm_to_vmem [thread:$0]  %s7, 1024, %s78, [#allocation9], 64, 64, 4
    $region33: #{tpu_custom_call.1} parent=1 // pred_fallthru
      _
    // Predicated region
    $region34: #{tpu_custom_call.1} parent=1 // pred_check
      _
    $region35: #{tpu_custom_call.1} parent=1 // pred_check_branch
      %85 = sbr.rel (0) target = $region37
    $region36: #{tpu_custom_call.1} parent=1 // pred_region
      _
    $region37: #{tpu_custom_call.1} parent=1 // pred_fallthru
      _
    // Predicated region
    $region38: #{tpu_custom_call.1} parent=1 // pred_check
      _
    $region39: #{tpu_custom_call.1} parent=1 // pred_check_branch
      %87 = sbr.rel (0) target = $region41
    $region40: #{tpu_custom_call.1} parent=1 // pred_region
      %88 = dma.done [#allocation3], 256
    $region41: #{tpu_custom_call.1} parent=1 // pred_fallthru
      _
    // Predicated region
    $region42: #{tpu_custom_call.1} parent=1 // pred_check
      _
    $region43: #{tpu_custom_call.1} parent=1 // pred_check_branch
      %90 = sbr.rel (0) target = $region45
    $region44: #{tpu_custom_call.1} parent=1 // pred_region
      %91 = dma.done [#allocation6], 5120
    $region45: #{tpu_custom_call.1} parent=1 // pred_fallthru
      _
    // Predicated region
    $region46: #{tpu_custom_call.1} parent=1 // pred_check
      _
    $region47: #{tpu_custom_call.1} parent=1 // pred_check_branch
      %93 = sbr.rel (0) target = $region49
    $region48: #{tpu_custom_call.1} parent=1 // pred_region
      %94 = dma.done [#allocation6], 20480
    $region49: #{tpu_custom_call.1} parent=1 // pred_fallthru
      _
    // Predicated region
    $region50: #{tpu_custom_call.1} parent=1 // pred_check
      _
    $region51: #{tpu_custom_call.1} parent=1 // pred_check_branch
      %96 = sbr.rel (0) target = $region53
    $region52: #{tpu_custom_call.1} parent=1 // pred_region
      %97 = dma.done [#allocation9], 4096
    $region53: #{tpu_custom_call.1} parent=1 // pred_fallthru
      _
    // Predicated region
    $region54: #{tpu_custom_call.1} parent=1 // pred_check
      _
    $region55: #{tpu_custom_call.1} parent=1 // pred_check_branch
      %99 = sbr.rel (0) target = $region57
    $region56: #{tpu_custom_call.1} parent=1 // pred_region
      %100 = dma.done [#allocation9], 1024
    $region57: #{tpu_custom_call.1} parent=1 // pred_fallthru
      _
    %v102 = vld [vmem:[#allocation2] sm:$0xf]
    %v103 = vld [vmem:[#allocation2 + $0x4] sm:$0xf]
    %v104 = vld [vmem:[#allocation2 + $0x8] sm:$0xf]
    %v105 = vld [vmem:[#allocation2 + $0xc] sm:$0xf]
    %v106 = vld [vmem:[#allocation5] sm:$0xff]
    %v107 = vld [vmem:[#allocation5 + $0x8] sm:$0xff]
    %v108 = vld [vmem:[#allocation5 + $0x10] sm:$0xf]
    %v109 = vld [vmem:[#allocation5 + $0x14] sm:$0xff]
    %v110 = vld [vmem:[#allocation5 + $0x1c] sm:$0xff]
    %v111 = vld [vmem:[#allocation5 + $0x24] sm:$0xf]
    %v112 = vld [vmem:[#allocation5 + $0x28] sm:$0xff]
    %v113 = vld [vmem:[#allocation5 + $0x30] sm:$0xff]
    %v114 = vld [vmem:[#allocation5 + $0x38] sm:$0xf]
    %v115 = vld [vmem:[#allocation5 + $0x3c] sm:$0xff]
    %v116 = vld [vmem:[#allocation5 + $0x44] sm:$0xff]
    %v117 = vld [vmem:[#allocation5 + $0x4c] sm:$0xf]
    %v118 = vld [vmem:[#allocation5 + $0x50] sm:$0xff]
    %v119 = vld [vmem:[#allocation5 + $0x58] sm:$0xff]
    %v120 = vld [vmem:[#allocation5 + $0x60] sm:$0xf]
    %v121 = vld [vmem:[#allocation5 + $0x64] sm:$0xff]
    %v122 = vld [vmem:[#allocation5 + $0x6c] sm:$0xff]
    %v123 = vld [vmem:[#allocation5 + $0x74] sm:$0xf]
    %v124 = vld [vmem:[#allocation5 + $0x78] sm:$0xff]
    %v125 = vld [vmem:[#allocation5 + $0x80] sm:$0xff]
    %v126 = vld [vmem:[#allocation5 + $0x88] sm:$0xf]
    %v127 = vld [vmem:[#allocation5 + $0x8c] sm:$0xff]
    %v128 = vld [vmem:[#allocation5 + $0x94] sm:$0xff]
    %v129 = vld [vmem:[#allocation5 + $0x9c] sm:$0xf]
    %v130 = vld [vmem:[#allocation5 + $0xa0] sm:$0xff]
    %v131 = vld [vmem:[#allocation5 + $0xa8] sm:$0xff]
    %v132 = vld [vmem:[#allocation5 + $0xb0] sm:$0xf]
    %v133 = vld [vmem:[#allocation5 + $0xb4] sm:$0xff]
    %v134 = vld [vmem:[#allocation5 + $0xbc] sm:$0xff]
    %v135 = vld [vmem:[#allocation5 + $0xc4] sm:$0xf]
    %v136 = vld [vmem:[#allocation5 + $0xc8] sm:$0xff]
    %v137 = vld [vmem:[#allocation5 + $0xd0] sm:$0xff]
    %v138 = vld [vmem:[#allocation5 + $0xd8] sm:$0xf]
    %v139 = vld [vmem:[#allocation5 + $0xdc] sm:$0xff]
    %v140 = vld [vmem:[#allocation5 + $0xe4] sm:$0xff]
    %v141 = vld [vmem:[#allocation5 + $0xec] sm:$0xf]
    %v142 = vld [vmem:[#allocation5 + $0xf0] sm:$0xff]
    %v143 = vld [vmem:[#allocation5 + $0xf8] sm:$0xff]
    %v144 = vld [vmem:[#allocation5 + $0x100] sm:$0xf]
    %v145 = vld [vmem:[#allocation5 + $0x104] sm:$0xff]
    %v146 = vld [vmem:[#allocation5 + $0x10c] sm:$0xff]
    %v147 = vld [vmem:[#allocation5 + $0x114] sm:$0xf]
    %v148 = vld [vmem:[#allocation5 + $0x118] sm:$0xff]
    %v149 = vld [vmem:[#allocation5 + $0x120] sm:$0xff]
    %v150 = vld [vmem:[#allocation5 + $0x128] sm:$0xf]
    %v151 = vld [vmem:[#allocation5 + $0x12c] sm:$0xff]
    %v152 = vld [vmem:[#allocation5 + $0x134] sm:$0xff]
    %v153 = vld [vmem:[#allocation5 + $0x13c] sm:$0xf]
    %v154 = vld [vmem:[%s2] sm:$0x1f]
    %v156 = vlaneseq
    %v157 = vshrl.u32 %v156, 7
    %v158 = vsub.s32 0, %v157
    %v159 = vrot.slane %v154, %v158
    %v160 = vlaneseq
    %v161 = vshrl.u32 %v160, 7
    %v162 = vsub.s32 1, %v161
    %v163 = vrot.slane %v154, %v162
    %v164 = vlaneseq
    %v165 = vshrl.u32 %v164, 7
    %v166 = vsub.s32 2, %v165
    %v167 = vrot.slane %v154, %v166
    %v168 = vlaneseq
    %v169 = vshrl.u32 %v168, 7
    %v170 = vsub.s32 3, %v169
    %v171 = vrot.slane %v154, %v170
    %v172 = vlaneseq
    %v173 = vshrl.u32 %v172, 7
    %v174 = vsub.s32 4, %v173
    %v175 = vrot.slane %v154, %v174
    %v185 = vunpack.c.l.b16 %v102
    %v186 = vunpack.c.l.b16 %v103
    %v187 = vunpack.c.l.b16 %v104
    %v188 = vunpack.c.l.b16 %v105
    %v189 = vpack.c.b16 %v186, %v185
    %v190 = vpack.c.b16 %v188, %v187
    %v241 = vunpack.c.l.b16 %v106
    %v242 = vunpack.c.h.b16 %v106
    %v243 = vunpack.c.l.b16 %v107
    %v244 = vunpack.c.h.b16 %v107
    %v245 = vunpack.c.l.b16 %v108
    %v246 = vunpack.c.l.b16 %v109
    %v247 = vunpack.c.h.b16 %v109
    %v248 = vunpack.c.l.b16 %v110
    %v249 = vunpack.c.h.b16 %v110
    %v250 = vunpack.c.l.b16 %v111
    %v251 = vunpack.c.l.b16 %v112
    %v252 = vunpack.c.h.b16 %v112
    %v253 = vunpack.c.l.b16 %v113
    %v254 = vunpack.c.h.b16 %v113
    %v255 = vunpack.c.l.b16 %v114
    %v256 = vunpack.c.l.b16 %v115
    %v257 = vunpack.c.h.b16 %v115
    %v258 = vunpack.c.l.b16 %v116
    %v259 = vunpack.c.h.b16 %v116
    %v260 = vunpack.c.l.b16 %v117
    %v261 = vunpack.c.l.b16 %v118
    %v262 = vunpack.c.h.b16 %v118
    %v263 = vunpack.c.l.b16 %v119
    %v264 = vunpack.c.h.b16 %v119
    %v265 = vunpack.c.l.b16 %v120
    %v266 = vunpack.c.l.b16 %v121
    %v267 = vunpack.c.h.b16 %v121
    %v268 = vunpack.c.l.b16 %v122
    %v269 = vunpack.c.h.b16 %v122
    %v270 = vunpack.c.l.b16 %v123
    %v271 = vunpack.c.l.b16 %v124
    %v272 = vunpack.c.h.b16 %v124
    %v273 = vunpack.c.l.b16 %v125
    %v274 = vunpack.c.h.b16 %v125
    %v275 = vunpack.c.l.b16 %v126
    %v276 = vunpack.c.l.b16 %v127
    %v277 = vunpack.c.h.b16 %v127
    %v278 = vunpack.c.l.b16 %v128
    %v279 = vunpack.c.h.b16 %v128
    %v280 = vunpack.c.l.b16 %v129
    %v281 = vunpack.c.l.b16 %v130
    %v282 = vunpack.c.h.b16 %v130
    %v283 = vunpack.c.l.b16 %v131
    %v284 = vunpack.c.h.b16 %v131
    %v285 = vunpack.c.l.b16 %v132
    %v286 = vunpack.c.l.b16 %v133
    %v287 = vunpack.c.h.b16 %v133
    %v288 = vunpack.c.l.b16 %v134
    %v289 = vunpack.c.h.b16 %v134
    %v290 = vunpack.c.l.b16 %v135
    %v291 = vunpack.c.l.b16 %v136
    %v292 = vunpack.c.h.b16 %v136
    %v293 = vunpack.c.l.b16 %v137
    %v294 = vunpack.c.h.b16 %v137
    %v295 = vunpack.c.l.b16 %v138
    %v296 = vunpack.c.l.b16 %v139
    %v297 = vunpack.c.h.b16 %v139
    %v298 = vunpack.c.l.b16 %v140
    %v299 = vunpack.c.h.b16 %v140
    %v300 = vunpack.c.l.b16 %v141
    %v301 = vunpack.c.l.b16 %v142
    %v302 = vunpack.c.h.b16 %v142
    %v303 = vunpack.c.l.b16 %v143
    %v304 = vunpack.c.h.b16 %v143
    %v305 = vunpack.c.l.b16 %v144
    %v306 = vunpack.c.l.b16 %v145
    %v307 = vunpack.c.h.b16 %v145
    %v308 = vunpack.c.l.b16 %v146
    %v309 = vunpack.c.h.b16 %v146
    %v310 = vunpack.c.l.b16 %v147
    %v311 = vunpack.c.l.b16 %v148
    %v312 = vunpack.c.h.b16 %v148
    %v313 = vunpack.c.l.b16 %v149
    %v314 = vunpack.c.h.b16 %v149
    %v315 = vunpack.c.l.b16 %v150
    %v316 = vunpack.c.l.b16 %v151
    %v317 = vunpack.c.h.b16 %v151
    %v318 = vunpack.c.l.b16 %v152
    %v319 = vunpack.c.h.b16 %v152
    %v320 = vunpack.c.l.b16 %v153
    %v321 = vpack.c.b16 %v246, %v241
    %v322 = vpack.c.b16 %v247, %v242
    %v323 = vpack.c.b16 %v248, %v243
    %v324 = vpack.c.b16 %v249, %v244
    %v325 = vpack.c.b16 %v250, %v245
    %v326 = vpack.c.b16 %v256, %v251
    %v327 = vpack.c.b16 %v257, %v252
    %v328 = vpack.c.b16 %v258, %v253
    %v329 = vpack.c.b16 %v259, %v254
    %v330 = vpack.c.b16 %v260, %v255
    %v331 = vpack.c.b16 %v266, %v261
    %v332 = vpack.c.b16 %v267, %v262
    %v333 = vpack.c.b16 %v268, %v263
    %v334 = vpack.c.b16 %v269, %v264
    %v335 = vpack.c.b16 %v270, %v265
    %v336 = vpack.c.b16 %v276, %v271
    %v337 = vpack.c.b16 %v277, %v272
    %v338 = vpack.c.b16 %v278, %v273
    %v339 = vpack.c.b16 %v279, %v274
    %v340 = vpack.c.b16 %v280, %v275
    %v341 = vpack.c.b16 %v286, %v281
    %v342 = vpack.c.b16 %v287, %v282
    %v343 = vpack.c.b16 %v288, %v283
    %v344 = vpack.c.b16 %v289, %v284
    %v345 = vpack.c.b16 %v290, %v285
    %v346 = vpack.c.b16 %v296, %v291
    %v347 = vpack.c.b16 %v297, %v292
    %v348 = vpack.c.b16 %v298, %v293
    %v349 = vpack.c.b16 %v299, %v294
    %v350 = vpack.c.b16 %v300, %v295
    %v351 = vpack.c.b16 %v306, %v301
    %v352 = vpack.c.b16 %v307, %v302
    %v353 = vpack.c.b16 %v308, %v303
    %v354 = vpack.c.b16 %v309, %v304
    %v355 = vpack.c.b16 %v310, %v305
    %v356 = vpack.c.b16 %v316, %v311
    %v357 = vpack.c.b16 %v317, %v312
    %v358 = vpack.c.b16 %v318, %v313
    %v359 = vpack.c.b16 %v319, %v314
    %v360 = vpack.c.b16 %v320, %v315
    %401 = vmatprep.subr.bf16.mxu0 %v322
    %402 = vmatpush1.bf16.msra.mxu0 %v321
    %403 = vmatprep.subr.bf16.mxu0 %v327
    %404 = vmatpush1.bf16.msra.mxu0 %v326
    %405 = vmatprep.subr.bf16.mxu0 %v332
    %406 = vmatpush1.bf16.msra.mxu0 %v331
    %407 = vmatprep.subr.bf16.mxu0 %v337
    %408 = vmatpush1.bf16.msra.mxu0 %v336
    %409 = vmatprep.subr.bf16.mxu0 %v342
    %410 = vmatpush1.bf16.msra.mxu0 %v341
    %411 = vmatprep.subr.bf16.mxu0 %v347
    %412 = vmatpush1.bf16.msra.mxu0 %v346
    %413 = vmatprep.subr.bf16.mxu0 %v352
    %414 = vmatpush1.bf16.msra.mxu0 %v351
    %415 = vmatprep.subr.bf16.mxu0 %v357
    %416 = vmatpush1.bf16.msra.mxu0 %v356
    %417 = vmatprep.subr.bf16.mxu0 0
    %418 = vmatpush1.bf16.msra.mxu0 0
    %419 = vmatprep.subr.bf16.mxu0 0
    %420 = vmatpush1.bf16.msra.mxu0 0
    %421 = vmatprep.subr.bf16.mxu0 0
    %422 = vmatpush1.bf16.msra.mxu0 0
    %423 = vmatprep.subr.bf16.mxu0 0
    %424 = vmatpush1.bf16.msra.mxu0 0
    %425 = vmatprep.subr.bf16.mxu0 0
    %426 = vmatpush1.bf16.msra.mxu0 0
    %427 = vmatprep.subr.bf16.mxu0 0
    %428 = vmatpush1.bf16.msra.mxu0 0
    %429 = vmatprep.subr.bf16.mxu0 0
    %430 = vmatpush1.bf16.msra.mxu0 0
    %431 = vmatprep.subr.bf16.mxu0 0
    %432 = vmatpush1.bf16.msra.mxu0 0
    %433 = vmatprep.mubr.bf16.mxu0 0
    %434 = vmatmul.mubr.bf16.gmra.mrb[0].mxu0 %v189
    %v435 = vpop.f32.mrb[0].mxu0
    %v436 = vadd.f32 %v159, %v435
    %v437 = vpop.f32.mrb[0].mxu0
    %v438 = vadd.f32 %v163, %v437
    %v439 = vpop.f32.mrb[0].mxu0
    %v440 = vadd.f32 %v159, %v439
    %v441 = vpop.f32.mrb[0].mxu0
    %v442 = vadd.f32 %v163, %v441
    %443 = vmatprep.mubr.bf16.mxu0 0
    %444 = vmatmul.mubr.bf16.gmra.mrb[0].mxu0 %v190
    %v445 = vpop.f32.mrb[0].mxu0
    %v446 = vadd.f32 %v159, %v445
    %v447 = vpop.f32.mrb[0].mxu0
    %v448 = vadd.f32 %v163, %v447
    %v449 = vpop.f32.mrb[0].mxu0
    %v450 = vadd.f32 %v159, %v449
    %v451 = vpop.f32.mrb[0].mxu0
    %v452 = vadd.f32 %v163, %v451
    %453 = vdwg.mxu0
    %454 = vmatprep.subr.bf16.mxu0 %v324
    %455 = vmatpush1.bf16.msra.mxu0 %v323
    %456 = vmatprep.subr.bf16.mxu0 %v329
    %457 = vmatpush1.bf16.msra.mxu0 %v328
    %458 = vmatprep.subr.bf16.mxu0 %v334
    %459 = vmatpush1.bf16.msra.mxu0 %v333
    %460 = vmatprep.subr.bf16.mxu0 %v339
    %461 = vmatpush1.bf16.msra.mxu0 %v338
    %462 = vmatprep.subr.bf16.mxu0 %v344
    %463 = vmatpush1.bf16.msra.mxu0 %v343
    %464 = vmatprep.subr.bf16.mxu0 %v349
    %465 = vmatpush1.bf16.msra.mxu0 %v348
    %466 = vmatprep.subr.bf16.mxu0 %v354
    %467 = vmatpush1.bf16.msra.mxu0 %v353
    %468 = vmatprep.subr.bf16.mxu0 %v359
    %469 = vmatpush1.bf16.msra.mxu0 %v358
    %470 = vmatprep.subr.bf16.mxu0 0
    %471 = vmatpush1.bf16.msra.mxu0 0
    %472 = vmatprep.subr.bf16.mxu0 0
    %473 = vmatpush1.bf16.msra.mxu0 0
    %474 = vmatprep.subr.bf16.mxu0 0
    %475 = vmatpush1.bf16.msra.mxu0 0
    %476 = vmatprep.subr.bf16.mxu0 0
    %477 = vmatpush1.bf16.msra.mxu0 0
    %478 = vmatprep.subr.bf16.mxu0 0
    %479 = vmatpush1.bf16.msra.mxu0 0
    %480 = vmatprep.subr.bf16.mxu0 0
    %481 = vmatpush1.bf16.msra.mxu0 0
    %482 = vmatprep.subr.bf16.mxu0 0
    %483 = vmatpush1.bf16.msra.mxu0 0
    %484 = vmatprep.subr.bf16.mxu0 0
    %485 = vmatpush1.bf16.msra.mxu0 0
    %486 = vmatprep.mubr.bf16.mxu0 0
    %487 = vmatmul.mubr.bf16.gmra.mrb[0].mxu0 %v189
    %v488 = vpop.f32.mrb[0].mxu0
    %v489 = vadd.f32 %v167, %v488
    %v490 = vpop.f32.mrb[0].mxu0
    %v491 = vadd.f32 %v171, %v490
    %v492 = vpop.f32.mrb[0].mxu0
    %v493 = vadd.f32 %v167, %v492
    %v494 = vpop.f32.mrb[0].mxu0
    %v495 = vadd.f32 %v171, %v494
    %496 = vmatprep.mubr.bf16.mxu0 0
    %497 = vmatmul.mubr.bf16.gmra.mrb[0].mxu0 %v190
    %v498 = vpop.f32.mrb[0].mxu0
    %v499 = vadd.f32 %v167, %v498
    %v500 = vpop.f32.mrb[0].mxu0
    %v501 = vadd.f32 %v171, %v500
    %v502 = vpop.f32.mrb[0].mxu0
    %v503 = vadd.f32 %v167, %v502
    %v504 = vpop.f32.mrb[0].mxu0
    %v505 = vadd.f32 %v171, %v504
    %506 = vdwg.mxu0
    %507 = vmatprep.subr.bf16.mxu0 0
    %508 = vmatpush1.bf16.msra.mxu0 %v325
    %509 = vmatprep.subr.bf16.mxu0 0
    %510 = vmatpush1.bf16.msra.mxu0 %v330
    %511 = vmatprep.subr.bf16.mxu0 0
    %512 = vmatpush1.bf16.msra.mxu0 %v335
    %513 = vmatprep.subr.bf16.mxu0 0
    %514 = vmatpush1.bf16.msra.mxu0 %v340
    %515 = vmatprep.subr.bf16.mxu0 0
    %516 = vmatpush1.bf16.msra.mxu0 %v345
    %517 = vmatprep.subr.bf16.mxu0 0
    %518 = vmatpush1.bf16.msra.mxu0 %v350
    %519 = vmatprep.subr.bf16.mxu0 0
    %520 = vmatpush1.bf16.msra.mxu0 %v355
    %521 = vmatprep.subr.bf16.mxu0 0
    %522 = vmatpush1.bf16.msra.mxu0 %v360
    %523 = vmatprep.subr.bf16.mxu0 0
    %524 = vmatpush1.bf16.msra.mxu0 0
    %525 = vmatprep.subr.bf16.mxu0 0
    %526 = vmatpush1.bf16.msra.mxu0 0
    %527 = vmatprep.subr.bf16.mxu0 0
    %528 = vmatpush1.bf16.msra.mxu0 0
    %529 = vmatprep.subr.bf16.mxu0 0
    %530 = vmatpush1.bf16.msra.mxu0 0
    %531 = vmatprep.subr.bf16.mxu0 0
    %532 = vmatpush1.bf16.msra.mxu0 0
    %533 = vmatprep.subr.bf16.mxu0 0
    %534 = vmatpush1.bf16.msra.mxu0 0
    %535 = vmatprep.subr.bf16.mxu0 0
    %536 = vmatpush1.bf16.msra.mxu0 0
    %537 = vmatprep.subr.bf16.mxu0 0
    %538 = vmatpush1.bf16.msra.mxu0 0
    %539 = vmatprep.mubr.bf16.mxu0 0
    %540 = vmatmul.mubr.bf16.gmra.mrb[0].mxu0 %v189
    %v541 = vpop.f32.mrb[0].mxu0
    %v542 = vadd.f32 %v175, %v541
    %v543 = vpop.f32.mrb[0].mxu0
    %v544 = vpop.f32.mrb[0].mxu0
    %v545 = vadd.f32 %v175, %v544
    %v546 = vpop.f32.mrb[0].mxu0
    %547 = vmatprep.mubr.bf16.mxu0 0
    %548 = vmatmul.mubr.bf16.gmra.mrb[0].mxu0 %v190
    %v549 = vpop.f32.mrb[0].mxu0
    %v550 = vadd.f32 %v175, %v549
    %v551 = vpop.f32.mrb[0].mxu0
    %v552 = vpop.f32.mrb[0].mxu0
    %v553 = vadd.f32 %v175, %v552
    %v554 = vpop.f32.mrb[0].mxu0
    %555 = vdwg.mxu0
    %v556 = vmax.f32 %v436, 0.0
    %v557 = vmax.f32 %v438, 0.0
    %v558 = vmax.f32 %v489, 0.0
    %v559 = vmax.f32 %v491, 0.0
    %v560 = vmax.f32 %v542, 0.0
    %v561 = vmax.f32 %v440, 0.0
    %v562 = vmax.f32 %v442, 0.0
    %v563 = vmax.f32 %v493, 0.0
    %v564 = vmax.f32 %v495, 0.0
    %v565 = vmax.f32 %v545, 0.0
    %v566 = vmax.f32 %v446, 0.0
    %v567 = vmax.f32 %v448, 0.0
    %v568 = vmax.f32 %v499, 0.0
    %v569 = vmax.f32 %v501, 0.0
    %v570 = vmax.f32 %v550, 0.0
    %v571 = vmax.f32 %v450, 0.0
    %v572 = vmax.f32 %v452, 0.0
    %v573 = vmax.f32 %v503, 0.0
    %v574 = vmax.f32 %v505, 0.0
    %v575 = vmax.f32 %v553, 0.0
    %v576 = vpack.c.bf16 %v561, %v556
    %v577 = vpack.c.bf16 %v562, %v557
    %v578 = vpack.c.bf16 %v563, %v558
    %v579 = vpack.c.bf16 %v564, %v559
    %v580 = vpack.c.bf16 %v565, %v560
    %v581 = vpack.c.bf16 %v571, %v566
    %v582 = vpack.c.bf16 %v572, %v567
    %v583 = vpack.c.bf16 %v573, %v568
    %v584 = vpack.c.bf16 %v574, %v569
    %v585 = vpack.c.bf16 %v575, %v570
    %v586 = vld [vmem:[#allocation7] sm:$0xff]
    %v587 = vld [vmem:[#allocation7 + $0x8] sm:$0xff]
    %v588 = vld [vmem:[#allocation7 + $0x10] sm:$0xff]
    %v589 = vld [vmem:[#allocation7 + $0x18] sm:$0xff]
    %v590 = vld [vmem:[#allocation7 + $0x20] sm:$0xff]
    %v591 = vld [vmem:[#allocation7 + $0x28] sm:$0xff]
    %v592 = vld [vmem:[#allocation7 + $0x30] sm:$0xff]
    %v593 = vld [vmem:[#allocation7 + $0x38] sm:$0xff]
    %v594 = vld [vmem:[#allocation7 + $0x40] sm:$0xff]
    %v595 = vld [vmem:[#allocation7 + $0x48] sm:$0xff]
    %v596 = vld [vmem:[#allocation7 + $0x50] sm:$0xff]
    %v597 = vld [vmem:[#allocation7 + $0x58] sm:$0xff]
    %v598 = vld [vmem:[#allocation7 + $0x60] sm:$0xff]
    %v599 = vld [vmem:[#allocation7 + $0x68] sm:$0xff]
    %v600 = vld [vmem:[#allocation7 + $0x70] sm:$0xff]
    %v601 = vld [vmem:[#allocation7 + $0x78] sm:$0xff]
    %v602 = vld [vmem:[#allocation7 + $0x80] sm:$0xff]
    %v603 = vld [vmem:[#allocation7 + $0x88] sm:$0xff]
    %v604 = vld [vmem:[#allocation7 + $0x90] sm:$0xff]
    %v605 = vld [vmem:[#allocation7 + $0x98] sm:$0xff]
    %v606 = vld [vmem:[#allocation7 + $0xa0] sm:$0xff]
    %v607 = vld [vmem:[#allocation7 + $0xa8] sm:$0xff]
    %v608 = vld [vmem:[#allocation7 + $0xb0] sm:$0xff]
    %v609 = vld [vmem:[#allocation7 + $0xb8] sm:$0xff]
    %v610 = vld [vmem:[#allocation7 + $0xc0] sm:$0xff]
    %v611 = vld [vmem:[#allocation7 + $0xc8] sm:$0xff]
    %v612 = vld [vmem:[#allocation7 + $0xd0] sm:$0xff]
    %v613 = vld [vmem:[#allocation7 + $0xd8] sm:$0xff]
    %v614 = vld [vmem:[#allocation7 + $0xe0] sm:$0xff]
    %v615 = vld [vmem:[#allocation7 + $0xe8] sm:$0xff]
    %v616 = vld [vmem:[#allocation7 + $0xf0] sm:$0xff]
    %v617 = vld [vmem:[#allocation7 + $0xf8] sm:$0xff]
    %v618 = vld [vmem:[#allocation7 + $0x100] sm:$0xff]
    %v619 = vld [vmem:[#allocation7 + $0x108] sm:$0xff]
    %v620 = vld [vmem:[#allocation7 + $0x110] sm:$0xff]
    %v621 = vld [vmem:[#allocation7 + $0x118] sm:$0xff]
    %v622 = vld [vmem:[#allocation7 + $0x120] sm:$0xff]
    %v623 = vld [vmem:[#allocation7 + $0x128] sm:$0xff]
    %v624 = vld [vmem:[#allocation7 + $0x130] sm:$0xff]
    %v625 = vld [vmem:[#allocation7 + $0x138] sm:$0xff]
    %v626 = vld [vmem:[#allocation7 + $0x140] sm:$0xff]
    %v627 = vld [vmem:[#allocation7 + $0x148] sm:$0xff]
    %v628 = vld [vmem:[#allocation7 + $0x150] sm:$0xff]
    %v629 = vld [vmem:[#allocation7 + $0x158] sm:$0xff]
    %v630 = vld [vmem:[#allocation7 + $0x160] sm:$0xff]
    %v631 = vld [vmem:[#allocation7 + $0x168] sm:$0xff]
    %v632 = vld [vmem:[#allocation7 + $0x170] sm:$0xff]
    %v633 = vld [vmem:[#allocation7 + $0x178] sm:$0xff]
    %v634 = vld [vmem:[#allocation7 + $0x180] sm:$0xff]
    %v635 = vld [vmem:[#allocation7 + $0x188] sm:$0xff]
    %v636 = vld [vmem:[#allocation7 + $0x190] sm:$0xff]
    %v637 = vld [vmem:[#allocation7 + $0x198] sm:$0xff]
    %v638 = vld [vmem:[#allocation7 + $0x1a0] sm:$0xff]
    %v639 = vld [vmem:[#allocation7 + $0x1a8] sm:$0xff]
    %v640 = vld [vmem:[#allocation7 + $0x1b0] sm:$0xff]
    %v641 = vld [vmem:[#allocation7 + $0x1b8] sm:$0xff]
    %v642 = vld [vmem:[#allocation7 + $0x1c0] sm:$0xff]
    %v643 = vld [vmem:[#allocation7 + $0x1c8] sm:$0xff]
    %v644 = vld [vmem:[#allocation7 + $0x1d0] sm:$0xff]
    %v645 = vld [vmem:[#allocation7 + $0x1d8] sm:$0xff]
    %v646 = vld [vmem:[#allocation7 + $0x1e0] sm:$0xff]
    %v647 = vld [vmem:[#allocation7 + $0x1e8] sm:$0xff]
    %v648 = vld [vmem:[#allocation7 + $0x1f0] sm:$0xff]
    %v649 = vld [vmem:[#allocation7 + $0x1f8] sm:$0xff]
    %v650 = vld [vmem:[#allocation7 + $0x200] sm:$0xff]
    %v651 = vld [vmem:[#allocation7 + $0x208] sm:$0xff]
    %v652 = vld [vmem:[#allocation7 + $0x210] sm:$0xff]
    %v653 = vld [vmem:[#allocation7 + $0x218] sm:$0xff]
    %v654 = vld [vmem:[#allocation7 + $0x220] sm:$0xff]
    %v655 = vld [vmem:[#allocation7 + $0x228] sm:$0xff]
    %v656 = vld [vmem:[#allocation7 + $0x230] sm:$0xff]
    %v657 = vld [vmem:[#allocation7 + $0x238] sm:$0xff]
    %v658 = vld [vmem:[#allocation7 + $0x240] sm:$0xff]
    %v659 = vld [vmem:[#allocation7 + $0x248] sm:$0xff]
    %v660 = vld [vmem:[#allocation7 + $0x250] sm:$0xff]
    %v661 = vld [vmem:[#allocation7 + $0x258] sm:$0xff]
    %v662 = vld [vmem:[#allocation7 + $0x260] sm:$0xff]
    %v663 = vld [vmem:[#allocation7 + $0x268] sm:$0xff]
    %v664 = vld [vmem:[#allocation7 + $0x270] sm:$0xff]
    %v665 = vld [vmem:[#allocation7 + $0x278] sm:$0xff]
    %v666 = vld [vmem:[#allocation7 + $0x280] sm:$0xff]
    %v667 = vld [vmem:[#allocation7 + $0x288] sm:$0xff]
    %v668 = vld [vmem:[#allocation7 + $0x290] sm:$0xff]
    %v669 = vld [vmem:[#allocation7 + $0x298] sm:$0xff]
    %v670 = vld [vmem:[#allocation7 + $0x2a0] sm:$0xff]
    %v671 = vld [vmem:[#allocation7 + $0x2a8] sm:$0xff]
    %v672 = vld [vmem:[#allocation7 + $0x2b0] sm:$0xff]
    %v673 = vld [vmem:[#allocation7 + $0x2b8] sm:$0xff]
    %v674 = vld [vmem:[#allocation7 + $0x2c0] sm:$0xff]
    %v675 = vld [vmem:[#allocation7 + $0x2c8] sm:$0xff]
    %v676 = vld [vmem:[#allocation7 + $0x2d0] sm:$0xff]
    %v677 = vld [vmem:[#allocation7 + $0x2d8] sm:$0xff]
    %v678 = vld [vmem:[#allocation7 + $0x2e0] sm:$0xff]
    %v679 = vld [vmem:[#allocation7 + $0x2e8] sm:$0xff]
    %v680 = vld [vmem:[#allocation7 + $0x2f0] sm:$0xff]
    %v681 = vld [vmem:[#allocation7 + $0x2f8] sm:$0xff]
    %v682 = vld [vmem:[#allocation7 + $0x300] sm:$0xff]
    %v683 = vld [vmem:[#allocation7 + $0x308] sm:$0xff]
    %v684 = vld [vmem:[#allocation7 + $0x310] sm:$0xff]
    %v685 = vld [vmem:[#allocation7 + $0x318] sm:$0xff]
    %v686 = vld [vmem:[#allocation7 + $0x320] sm:$0xff]
    %v687 = vld [vmem:[#allocation7 + $0x328] sm:$0xff]
    %v688 = vld [vmem:[#allocation7 + $0x330] sm:$0xff]
    %v689 = vld [vmem:[#allocation7 + $0x338] sm:$0xff]
    %v690 = vld [vmem:[#allocation7 + $0x340] sm:$0xff]
    %v691 = vld [vmem:[#allocation7 + $0x348] sm:$0xff]
    %v692 = vld [vmem:[#allocation7 + $0x350] sm:$0xff]
    %v693 = vld [vmem:[#allocation7 + $0x358] sm:$0xff]
    %v694 = vld [vmem:[#allocation7 + $0x360] sm:$0xff]
    %v695 = vld [vmem:[#allocation7 + $0x368] sm:$0xff]
    %v696 = vld [vmem:[#allocation7 + $0x370] sm:$0xff]
    %v697 = vld [vmem:[#allocation7 + $0x378] sm:$0xff]
    %v698 = vld [vmem:[#allocation7 + $0x380] sm:$0xff]
    %v699 = vld [vmem:[#allocation7 + $0x388] sm:$0xff]
    %v700 = vld [vmem:[#allocation7 + $0x390] sm:$0xff]
    %v701 = vld [vmem:[#allocation7 + $0x398] sm:$0xff]
    %v702 = vld [vmem:[#allocation7 + $0x3a0] sm:$0xff]
    %v703 = vld [vmem:[#allocation7 + $0x3a8] sm:$0xff]
    %v704 = vld [vmem:[#allocation7 + $0x3b0] sm:$0xff]
    %v705 = vld [vmem:[#allocation7 + $0x3b8] sm:$0xff]
    %v706 = vld [vmem:[#allocation7 + $0x3c0] sm:$0xff]
    %v707 = vld [vmem:[#allocation7 + $0x3c8] sm:$0xff]
    %v708 = vld [vmem:[#allocation7 + $0x3d0] sm:$0xff]
    %v709 = vld [vmem:[#allocation7 + $0x3d8] sm:$0xff]
    %v710 = vld [vmem:[#allocation7 + $0x3e0] sm:$0xff]
    %v711 = vld [vmem:[#allocation7 + $0x3e8] sm:$0xff]
    %v712 = vld [vmem:[#allocation7 + $0x3f0] sm:$0xff]
    %v713 = vld [vmem:[#allocation7 + $0x3f8] sm:$0xff]
    %v714 = vld [vmem:[#allocation7 + $0x400] sm:$0xff]
    %v715 = vld [vmem:[#allocation7 + $0x408] sm:$0xff]
    %v716 = vld [vmem:[#allocation7 + $0x410] sm:$0xff]
    %v717 = vld [vmem:[#allocation7 + $0x418] sm:$0xff]
    %v718 = vld [vmem:[#allocation7 + $0x420] sm:$0xff]
    %v719 = vld [vmem:[#allocation7 + $0x428] sm:$0xff]
    %v720 = vld [vmem:[#allocation7 + $0x430] sm:$0xff]
    %v721 = vld [vmem:[#allocation7 + $0x438] sm:$0xff]
    %v722 = vld [vmem:[#allocation7 + $0x440] sm:$0xff]
    %v723 = vld [vmem:[#allocation7 + $0x448] sm:$0xff]
    %v724 = vld [vmem:[#allocation7 + $0x450] sm:$0xff]
    %v725 = vld [vmem:[#allocation7 + $0x458] sm:$0xff]
    %v726 = vld [vmem:[#allocation7 + $0x460] sm:$0xff]
    %v727 = vld [vmem:[#allocation7 + $0x468] sm:$0xff]
    %v728 = vld [vmem:[#allocation7 + $0x470] sm:$0xff]
    %v729 = vld [vmem:[#allocation7 + $0x478] sm:$0xff]
    %v730 = vld [vmem:[#allocation7 + $0x480] sm:$0xff]
    %v731 = vld [vmem:[#allocation7 + $0x488] sm:$0xff]
    %v732 = vld [vmem:[#allocation7 + $0x490] sm:$0xff]
    %v733 = vld [vmem:[#allocation7 + $0x498] sm:$0xff]
    %v734 = vld [vmem:[#allocation7 + $0x4a0] sm:$0xff]
    %v735 = vld [vmem:[#allocation7 + $0x4a8] sm:$0xff]
    %v736 = vld [vmem:[#allocation7 + $0x4b0] sm:$0xff]
    %v737 = vld [vmem:[#allocation7 + $0x4b8] sm:$0xff]
    %v738 = vld [vmem:[#allocation7 + $0x4c0] sm:$0xff]
    %v739 = vld [vmem:[#allocation7 + $0x4c8] sm:$0xff]
    %v740 = vld [vmem:[#allocation7 + $0x4d0] sm:$0xff]
    %v741 = vld [vmem:[#allocation7 + $0x4d8] sm:$0xff]
    %v742 = vld [vmem:[#allocation7 + $0x4e0] sm:$0xff]
    %v743 = vld [vmem:[#allocation7 + $0x4e8] sm:$0xff]
    %v744 = vld [vmem:[#allocation7 + $0x4f0] sm:$0xff]
    %v745 = vld [vmem:[#allocation7 + $0x4f8] sm:$0xff]
    %v746 = vld [vmem:[%s4] sm:$0xf]
    %v748 = vlaneseq
    %v749 = vshrl.u32 %v748, 7
    %v750 = vsub.s32 0, %v749
    %v751 = vrot.slane %v746, %v750
    %v752 = vlaneseq
    %v753 = vshrl.u32 %v752, 7
    %v754 = vsub.s32 1, %v753
    %v755 = vrot.slane %v746, %v754
    %v756 = vlaneseq
    %v757 = vshrl.u32 %v756, 7
    %v758 = vsub.s32 2, %v757
    %v759 = vrot.slane %v746, %v758
    %v760 = vlaneseq
    %v761 = vshrl.u32 %v760, 7
    %v762 = vsub.s32 3, %v761
    %v763 = vrot.slane %v746, %v762
    %v928 = vunpack.c.l.b16 %v586
    %v929 = vunpack.c.h.b16 %v586
    %v930 = vunpack.c.l.b16 %v587
    %v931 = vunpack.c.h.b16 %v587
    %v932 = vunpack.c.l.b16 %v588
    %v933 = vunpack.c.h.b16 %v588
    %v934 = vunpack.c.l.b16 %v589
    %v935 = vunpack.c.h.b16 %v589
    %v936 = vunpack.c.l.b16 %v590
    %v937 = vunpack.c.h.b16 %v590
    %v938 = vunpack.c.l.b16 %v591
    %v939 = vunpack.c.h.b16 %v591
    %v940 = vunpack.c.l.b16 %v592
    %v941 = vunpack.c.h.b16 %v592
    %v942 = vunpack.c.l.b16 %v593
    %v943 = vunpack.c.h.b16 %v593
    %v944 = vunpack.c.l.b16 %v594
    %v945 = vunpack.c.h.b16 %v594
    %v946 = vunpack.c.l.b16 %v595
    %v947 = vunpack.c.h.b16 %v595
    %v948 = vunpack.c.l.b16 %v596
    %v949 = vunpack.c.h.b16 %v596
    %v950 = vunpack.c.l.b16 %v597
    %v951 = vunpack.c.h.b16 %v597
    %v952 = vunpack.c.l.b16 %v598
    %v953 = vunpack.c.h.b16 %v598
    %v954 = vunpack.c.l.b16 %v599
    %v955 = vunpack.c.h.b16 %v599
    %v956 = vunpack.c.l.b16 %v600
    %v957 = vunpack.c.h.b16 %v600
    %v958 = vunpack.c.l.b16 %v601
    %v959 = vunpack.c.h.b16 %v601
    %v960 = vunpack.c.l.b16 %v602
    %v961 = vunpack.c.h.b16 %v602
    %v962 = vunpack.c.l.b16 %v603
    %v963 = vunpack.c.h.b16 %v603
    %v964 = vunpack.c.l.b16 %v604
    %v965 = vunpack.c.h.b16 %v604
    %v966 = vunpack.c.l.b16 %v605
    %v967 = vunpack.c.h.b16 %v605
    %v968 = vunpack.c.l.b16 %v606
    %v969 = vunpack.c.h.b16 %v606
    %v970 = vunpack.c.l.b16 %v607
    %v971 = vunpack.c.h.b16 %v607
    %v972 = vunpack.c.l.b16 %v608
    %v973 = vunpack.c.h.b16 %v608
    %v974 = vunpack.c.l.b16 %v609
    %v975 = vunpack.c.h.b16 %v609
    %v976 = vunpack.c.l.b16 %v610
    %v977 = vunpack.c.h.b16 %v610
    %v978 = vunpack.c.l.b16 %v611
    %v979 = vunpack.c.h.b16 %v611
    %v980 = vunpack.c.l.b16 %v612
    %v981 = vunpack.c.h.b16 %v612
    %v982 = vunpack.c.l.b16 %v613
    %v983 = vunpack.c.h.b16 %v613
    %v984 = vunpack.c.l.b16 %v614
    %v985 = vunpack.c.h.b16 %v614
    %v986 = vunpack.c.l.b16 %v615
    %v987 = vunpack.c.h.b16 %v615
    %v988 = vunpack.c.l.b16 %v616
    %v989 = vunpack.c.h.b16 %v616
    %v990 = vunpack.c.l.b16 %v617
    %v991 = vunpack.c.h.b16 %v617
    %v992 = vunpack.c.l.b16 %v618
    %v993 = vunpack.c.h.b16 %v618
    %v994 = vunpack.c.l.b16 %v619
    %v995 = vunpack.c.h.b16 %v619
    %v996 = vunpack.c.l.b16 %v620
    %v997 = vunpack.c.h.b16 %v620
    %v998 = vunpack.c.l.b16 %v621
    %v999 = vunpack.c.h.b16 %v621
    %v1000 = vunpack.c.l.b16 %v622
    %v1001 = vunpack.c.h.b16 %v622
    %v1002 = vunpack.c.l.b16 %v623
    %v1003 = vunpack.c.h.b16 %v623
    %v1004 = vunpack.c.l.b16 %v624
    %v1005 = vunpack.c.h.b16 %v624
    %v1006 = vunpack.c.l.b16 %v625
    %v1007 = vunpack.c.h.b16 %v625
    %v1008 = vunpack.c.l.b16 %v626
    %v1009 = vunpack.c.h.b16 %v626
    %v1010 = vunpack.c.l.b16 %v627
    %v1011 = vunpack.c.h.b16 %v627
    %v1012 = vunpack.c.l.b16 %v628
    %v1013 = vunpack.c.h.b16 %v628
    %v1014 = vunpack.c.l.b16 %v629
    %v1015 = vunpack.c.h.b16 %v629
    %v1016 = vunpack.c.l.b16 %v630
    %v1017 = vunpack.c.h.b16 %v630
    %v1018 = vunpack.c.l.b16 %v631
    %v1019 = vunpack.c.h.b16 %v631
    %v1020 = vunpack.c.l.b16 %v632
    %v1021 = vunpack.c.h.b16 %v632
    %v1022 = vunpack.c.l.b16 %v633
    %v1023 = vunpack.c.h.b16 %v633
    %v1024 = vunpack.c.l.b16 %v634
    %v1025 = vunpack.c.h.b16 %v634
    %v1026 = vunpack.c.l.b16 %v635
    %v1027 = vunpack.c.h.b16 %v635
    %v1028 = vunpack.c.l.b16 %v636
    %v1029 = vunpack.c.h.b16 %v636
    %v1030 = vunpack.c.l.b16 %v637
    %v1031 = vunpack.c.h.b16 %v637
    %v1032 = vunpack.c.l.b16 %v638
    %v1033 = vunpack.c.h.b16 %v638
    %v1034 = vunpack.c.l.b16 %v639
    %v1035 = vunpack.c.h.b16 %v639
    %v1036 = vunpack.c.l.b16 %v640
    %v1037 = vunpack.c.h.b16 %v640
    %v1038 = vunpack.c.l.b16 %v641
    %v1039 = vunpack.c.h.b16 %v641
    %v1040 = vunpack.c.l.b16 %v642
    %v1041 = vunpack.c.h.b16 %v642
    %v1042 = vunpack.c.l.b16 %v643
    %v1043 = vunpack.c.h.b16 %v643
    %v1044 = vunpack.c.l.b16 %v644
    %v1045 = vunpack.c.h.b16 %v644
    %v1046 = vunpack.c.l.b16 %v645
    %v1047 = vunpack.c.h.b16 %v645
    %v1048 = vunpack.c.l.b16 %v646
    %v1049 = vunpack.c.h.b16 %v646
    %v1050 = vunpack.c.l.b16 %v647
    %v1051 = vunpack.c.h.b16 %v647
    %v1052 = vunpack.c.l.b16 %v648
    %v1053 = vunpack.c.h.b16 %v648
    %v1054 = vunpack.c.l.b16 %v649
    %v1055 = vunpack.c.h.b16 %v649
    %v1056 = vunpack.c.l.b16 %v650
    %v1057 = vunpack.c.h.b16 %v650
    %v1058 = vunpack.c.l.b16 %v651
    %v1059 = vunpack.c.h.b16 %v651
    %v1060 = vunpack.c.l.b16 %v652
    %v1061 = vunpack.c.h.b16 %v652
    %v1062 = vunpack.c.l.b16 %v653
    %v1063 = vunpack.c.h.b16 %v653
    %v1064 = vunpack.c.l.b16 %v654
    %v1065 = vunpack.c.h.b16 %v654
    %v1066 = vunpack.c.l.b16 %v655
    %v1067 = vunpack.c.h.b16 %v655
    %v1068 = vunpack.c.l.b16 %v656
    %v1069 = vunpack.c.h.b16 %v656
    %v1070 = vunpack.c.l.b16 %v657
    %v1071 = vunpack.c.h.b16 %v657
    %v1072 = vunpack.c.l.b16 %v658
    %v1073 = vunpack.c.h.b16 %v658
    %v1074 = vunpack.c.l.b16 %v659
    %v1075 = vunpack.c.h.b16 %v659
    %v1076 = vunpack.c.l.b16 %v660
    %v1077 = vunpack.c.h.b16 %v660
    %v1078 = vunpack.c.l.b16 %v661
    %v1079 = vunpack.c.h.b16 %v661
    %v1080 = vunpack.c.l.b16 %v662
    %v1081 = vunpack.c.h.b16 %v662
    %v1082 = vunpack.c.l.b16 %v663
    %v1083 = vunpack.c.h.b16 %v663
    %v1084 = vunpack.c.l.b16 %v664
    %v1085 = vunpack.c.h.b16 %v664
    %v1086 = vunpack.c.l.b16 %v665
    %v1087 = vunpack.c.h.b16 %v665
    %v1088 = vunpack.c.l.b16 %v666
    %v1089 = vunpack.c.h.b16 %v666
    %v1090 = vunpack.c.l.b16 %v667
    %v1091 = vunpack.c.h.b16 %v667
    %v1092 = vunpack.c.l.b16 %v668
    %v1093 = vunpack.c.h.b16 %v668
    %v1094 = vunpack.c.l.b16 %v669
    %v1095 = vunpack.c.h.b16 %v669
    %v1096 = vunpack.c.l.b16 %v670
    %v1097 = vunpack.c.h.b16 %v670
    %v1098 = vunpack.c.l.b16 %v671
    %v1099 = vunpack.c.h.b16 %v671
    %v1100 = vunpack.c.l.b16 %v672
    %v1101 = vunpack.c.h.b16 %v672
    %v1102 = vunpack.c.l.b16 %v673
    %v1103 = vunpack.c.h.b16 %v673
    %v1104 = vunpack.c.l.b16 %v674
    %v1105 = vunpack.c.h.b16 %v674
    %v1106 = vunpack.c.l.b16 %v675
    %v1107 = vunpack.c.h.b16 %v675
    %v1108 = vunpack.c.l.b16 %v676
    %v1109 = vunpack.c.h.b16 %v676
    %v1110 = vunpack.c.l.b16 %v677
    %v1111 = vunpack.c.h.b16 %v677
    %v1112 = vunpack.c.l.b16 %v678
    %v1113 = vunpack.c.h.b16 %v678
    %v1114 = vunpack.c.l.b16 %v679
    %v1115 = vunpack.c.h.b16 %v679
    %v1116 = vunpack.c.l.b16 %v680
    %v1117 = vunpack.c.h.b16 %v680
    %v1118 = vunpack.c.l.b16 %v681
    %v1119 = vunpack.c.h.b16 %v681
    %v1120 = vunpack.c.l.b16 %v682
    %v1121 = vunpack.c.h.b16 %v682
    %v1122 = vunpack.c.l.b16 %v683
    %v1123 = vunpack.c.h.b16 %v683
    %v1124 = vunpack.c.l.b16 %v684
    %v1125 = vunpack.c.h.b16 %v684
    %v1126 = vunpack.c.l.b16 %v685
    %v1127 = vunpack.c.h.b16 %v685
    %v1128 = vunpack.c.l.b16 %v686
    %v1129 = vunpack.c.h.b16 %v686
    %v1130 = vunpack.c.l.b16 %v687
    %v1131 = vunpack.c.h.b16 %v687
    %v1132 = vunpack.c.l.b16 %v688
    %v1133 = vunpack.c.h.b16 %v688
    %v1134 = vunpack.c.l.b16 %v689
    %v1135 = vunpack.c.h.b16 %v689
    %v1136 = vunpack.c.l.b16 %v690
    %v1137 = vunpack.c.h.b16 %v690
    %v1138 = vunpack.c.l.b16 %v691
    %v1139 = vunpack.c.h.b16 %v691
    %v1140 = vunpack.c.l.b16 %v692
    %v1141 = vunpack.c.h.b16 %v692
    %v1142 = vunpack.c.l.b16 %v693
    %v1143 = vunpack.c.h.b16 %v693
    %v1144 = vunpack.c.l.b16 %v694
    %v1145 = vunpack.c.h.b16 %v694
    %v1146 = vunpack.c.l.b16 %v695
    %v1147 = vunpack.c.h.b16 %v695
    %v1148 = vunpack.c.l.b16 %v696
    %v1149 = vunpack.c.h.b16 %v696
    %v1150 = vunpack.c.l.b16 %v697
    %v1151 = vunpack.c.h.b16 %v697
    %v1152 = vunpack.c.l.b16 %v698
    %v1153 = vunpack.c.h.b16 %v698
    %v1154 = vunpack.c.l.b16 %v699
    %v1155 = vunpack.c.h.b16 %v699
    %v1156 = vunpack.c.l.b16 %v700
    %v1157 = vunpack.c.h.b16 %v700
    %v1158 = vunpack.c.l.b16 %v701
    %v1159 = vunpack.c.h.b16 %v701
    %v1160 = vunpack.c.l.b16 %v702
    %v1161 = vunpack.c.h.b16 %v702
    %v1162 = vunpack.c.l.b16 %v703
    %v1163 = vunpack.c.h.b16 %v703
    %v1164 = vunpack.c.l.b16 %v704
    %v1165 = vunpack.c.h.b16 %v704
    %v1166 = vunpack.c.l.b16 %v705
    %v1167 = vunpack.c.h.b16 %v705
    %v1168 = vunpack.c.l.b16 %v706
    %v1169 = vunpack.c.h.b16 %v706
    %v1170 = vunpack.c.l.b16 %v707
    %v1171 = vunpack.c.h.b16 %v707
    %v1172 = vunpack.c.l.b16 %v708
    %v1173 = vunpack.c.h.b16 %v708
    %v1174 = vunpack.c.l.b16 %v709
    %v1175 = vunpack.c.h.b16 %v709
    %v1176 = vunpack.c.l.b16 %v710
    %v1177 = vunpack.c.h.b16 %v710
    %v1178 = vunpack.c.l.b16 %v711
    %v1179 = vunpack.c.h.b16 %v711
    %v1180 = vunpack.c.l.b16 %v712
    %v1181 = vunpack.c.h.b16 %v712
    %v1182 = vunpack.c.l.b16 %v713
    %v1183 = vunpack.c.h.b16 %v713
    %v1184 = vunpack.c.l.b16 %v714
    %v1185 = vunpack.c.h.b16 %v714
    %v1186 = vunpack.c.l.b16 %v715
    %v1187 = vunpack.c.h.b16 %v715
    %v1188 = vunpack.c.l.b16 %v716
    %v1189 = vunpack.c.h.b16 %v716
    %v1190 = vunpack.c.l.b16 %v717
    %v1191 = vunpack.c.h.b16 %v717
    %v1192 = vunpack.c.l.b16 %v718
    %v1193 = vunpack.c.h.b16 %v718
    %v1194 = vunpack.c.l.b16 %v719
    %v1195 = vunpack.c.h.b16 %v719
    %v1196 = vunpack.c.l.b16 %v720
    %v1197 = vunpack.c.h.b16 %v720
    %v1198 = vunpack.c.l.b16 %v721
    %v1199 = vunpack.c.h.b16 %v721
    %v1200 = vunpack.c.l.b16 %v722
    %v1201 = vunpack.c.h.b16 %v722
    %v1202 = vunpack.c.l.b16 %v723
    %v1203 = vunpack.c.h.b16 %v723
    %v1204 = vunpack.c.l.b16 %v724
    %v1205 = vunpack.c.h.b16 %v724
    %v1206 = vunpack.c.l.b16 %v725
    %v1207 = vunpack.c.h.b16 %v725
    %v1208 = vunpack.c.l.b16 %v726
    %v1209 = vunpack.c.h.b16 %v726
    %v1210 = vunpack.c.l.b16 %v727
    %v1211 = vunpack.c.h.b16 %v727
    %v1212 = vunpack.c.l.b16 %v728
    %v1213 = vunpack.c.h.b16 %v728
    %v1214 = vunpack.c.l.b16 %v729
    %v1215 = vunpack.c.h.b16 %v729
    %v1216 = vunpack.c.l.b16 %v730
    %v1217 = vunpack.c.h.b16 %v730
    %v1218 = vunpack.c.l.b16 %v731
    %v1219 = vunpack.c.h.b16 %v731
    %v1220 = vunpack.c.l.b16 %v732
    %v1221 = vunpack.c.h.b16 %v732
    %v1222 = vunpack.c.l.b16 %v733
    %v1223 = vunpack.c.h.b16 %v733
    %v1224 = vunpack.c.l.b16 %v734
    %v1225 = vunpack.c.h.b16 %v734
    %v1226 = vunpack.c.l.b16 %v735
    %v1227 = vunpack.c.h.b16 %v735
    %v1228 = vunpack.c.l.b16 %v736
    %v1229 = vunpack.c.h.b16 %v736
    %v1230 = vunpack.c.l.b16 %v737
    %v1231 = vunpack.c.h.b16 %v737
    %v1232 = vunpack.c.l.b16 %v738
    %v1233 = vunpack.c.h.b16 %v738
    %v1234 = vunpack.c.l.b16 %v739
    %v1235 = vunpack.c.h.b16 %v739
    %v1236 = vunpack.c.l.b16 %v740
    %v1237 = vunpack.c.h.b16 %v740
    %v1238 = vunpack.c.l.b16 %v741
    %v1239 = vunpack.c.h.b16 %v741
    %v1240 = vunpack.c.l.b16 %v742
    %v1241 = vunpack.c.h.b16 %v742
    %v1242 = vunpack.c.l.b16 %v743
    %v1243 = vunpack.c.h.b16 %v743
    %v1244 = vunpack.c.l.b16 %v744
    %v1245 = vunpack.c.h.b16 %v744
    %v1246 = vunpack.c.l.b16 %v745
    %v1247 = vunpack.c.h.b16 %v745
    %v1248 = vpack.c.b16 %v932, %v928
    %v1249 = vpack.c.b16 %v933, %v929
    %v1250 = vpack.c.b16 %v934, %v930
    %v1251 = vpack.c.b16 %v935, %v931
    %v1252 = vpack.c.b16 %v940, %v936
    %v1253 = vpack.c.b16 %v941, %v937
    %v1254 = vpack.c.b16 %v942, %v938
    %v1255 = vpack.c.b16 %v943, %v939
    %v1256 = vpack.c.b16 %v948, %v944
    %v1257 = vpack.c.b16 %v949, %v945
    %v1258 = vpack.c.b16 %v950, %v946
    %v1259 = vpack.c.b16 %v951, %v947
    %v1260 = vpack.c.b16 %v956, %v952
    %v1261 = vpack.c.b16 %v957, %v953
    %v1262 = vpack.c.b16 %v958, %v954
    %v1263 = vpack.c.b16 %v959, %v955
    %v1264 = vpack.c.b16 %v964, %v960
    %v1265 = vpack.c.b16 %v965, %v961
    %v1266 = vpack.c.b16 %v966, %v962
    %v1267 = vpack.c.b16 %v967, %v963
    %v1268 = vpack.c.b16 %v972, %v968
    %v1269 = vpack.c.b16 %v973, %v969
    %v1270 = vpack.c.b16 %v974, %v970
    %v1271 = vpack.c.b16 %v975, %v971
    %v1272 = vpack.c.b16 %v980, %v976
    %v1273 = vpack.c.b16 %v981, %v977
    %v1274 = vpack.c.b16 %v982, %v978
    %v1275 = vpack.c.b16 %v983, %v979
    %v1276 = vpack.c.b16 %v988, %v984
    %v1277 = vpack.c.b16 %v989, %v985
    %v1278 = vpack.c.b16 %v990, %v986
    %v1279 = vpack.c.b16 %v991, %v987
    %v1280 = vpack.c.b16 %v996, %v992
    %v1281 = vpack.c.b16 %v997, %v993
    %v1282 = vpack.c.b16 %v998, %v994
    %v1283 = vpack.c.b16 %v999, %v995
    %v1284 = vpack.c.b16 %v1004, %v1000
    %v1285 = vpack.c.b16 %v1005, %v1001
    %v1286 = vpack.c.b16 %v1006, %v1002
    %v1287 = vpack.c.b16 %v1007, %v1003
    %v1288 = vpack.c.b16 %v1012, %v1008
    %v1289 = vpack.c.b16 %v1013, %v1009
    %v1290 = vpack.c.b16 %v1014, %v1010
    %v1291 = vpack.c.b16 %v1015, %v1011
    %v1292 = vpack.c.b16 %v1020, %v1016
    %v1293 = vpack.c.b16 %v1021, %v1017
    %v1294 = vpack.c.b16 %v1022, %v1018
    %v1295 = vpack.c.b16 %v1023, %v1019
    %v1296 = vpack.c.b16 %v1028, %v1024
    %v1297 = vpack.c.b16 %v1029, %v1025
    %v1298 = vpack.c.b16 %v1030, %v1026
    %v1299 = vpack.c.b16 %v1031, %v1027
    %v1300 = vpack.c.b16 %v1036, %v1032
    %v1301 = vpack.c.b16 %v1037, %v1033
    %v1302 = vpack.c.b16 %v1038, %v1034
    %v1303 = vpack.c.b16 %v1039, %v1035
    %v1304 = vpack.c.b16 %v1044, %v1040
    %v1305 = vpack.c.b16 %v1045, %v1041
    %v1306 = vpack.c.b16 %v1046, %v1042
    %v1307 = vpack.c.b16 %v1047, %v1043
    %v1308 = vpack.c.b16 %v1052, %v1048
    %v1309 = vpack.c.b16 %v1053, %v1049
    %v1310 = vpack.c.b16 %v1054, %v1050
    %v1311 = vpack.c.b16 %v1055, %v1051
    %v1312 = vpack.c.b16 %v1060, %v1056
    %v1313 = vpack.c.b16 %v1061, %v1057
    %v1314 = vpack.c.b16 %v1062, %v1058
    %v1315 = vpack.c.b16 %v1063, %v1059
    %v1316 = vpack.c.b16 %v1068, %v1064
    %v1317 = vpack.c.b16 %v1069, %v1065
    %v1318 = vpack.c.b16 %v1070, %v1066
    %v1319 = vpack.c.b16 %v1071, %v1067
    %v1320 = vpack.c.b16 %v1076, %v1072
    %v1321 = vpack.c.b16 %v1077, %v1073
    %v1322 = vpack.c.b16 %v1078, %v1074
    %v1323 = vpack.c.b16 %v1079, %v1075
    %v1324 = vpack.c.b16 %v1084, %v1080
    %v1325 = vpack.c.b16 %v1085, %v1081
    %v1326 = vpack.c.b16 %v1086, %v1082
    %v1327 = vpack.c.b16 %v1087, %v1083
    %v1328 = vpack.c.b16 %v1092, %v1088
    %v1329 = vpack.c.b16 %v1093, %v1089
    %v1330 = vpack.c.b16 %v1094, %v1090
    %v1331 = vpack.c.b16 %v1095, %v1091
    %v1332 = vpack.c.b16 %v1100, %v1096
    %v1333 = vpack.c.b16 %v1101, %v1097
    %v1334 = vpack.c.b16 %v1102, %v1098
    %v1335 = vpack.c.b16 %v1103, %v1099
    %v1336 = vpack.c.b16 %v1108, %v1104
    %v1337 = vpack.c.b16 %v1109, %v1105
    %v1338 = vpack.c.b16 %v1110, %v1106
    %v1339 = vpack.c.b16 %v1111, %v1107
    %v1340 = vpack.c.b16 %v1116, %v1112
    %v1341 = vpack.c.b16 %v1117, %v1113
    %v1342 = vpack.c.b16 %v1118, %v1114
    %v1343 = vpack.c.b16 %v1119, %v1115
    %v1344 = vpack.c.b16 %v1124, %v1120
    %v1345 = vpack.c.b16 %v1125, %v1121
    %v1346 = vpack.c.b16 %v1126, %v1122
    %v1347 = vpack.c.b16 %v1127, %v1123
    %v1348 = vpack.c.b16 %v1132, %v1128
    %v1349 = vpack.c.b16 %v1133, %v1129
    %v1350 = vpack.c.b16 %v1134, %v1130
    %v1351 = vpack.c.b16 %v1135, %v1131
    %v1352 = vpack.c.b16 %v1140, %v1136
    %v1353 = vpack.c.b16 %v1141, %v1137
    %v1354 = vpack.c.b16 %v1142, %v1138
    %v1355 = vpack.c.b16 %v1143, %v1139
    %v1356 = vpack.c.b16 %v1148, %v1144
    %v1357 = vpack.c.b16 %v1149, %v1145
    %v1358 = vpack.c.b16 %v1150, %v1146
    %v1359 = vpack.c.b16 %v1151, %v1147
    %v1360 = vpack.c.b16 %v1156, %v1152
    %v1361 = vpack.c.b16 %v1157, %v1153
    %v1362 = vpack.c.b16 %v1158, %v1154
    %v1363 = vpack.c.b16 %v1159, %v1155
    %v1364 = vpack.c.b16 %v1164, %v1160
    %v1365 = vpack.c.b16 %v1165, %v1161
    %v1366 = vpack.c.b16 %v1166, %v1162
    %v1367 = vpack.c.b16 %v1167, %v1163
    %v1368 = vpack.c.b16 %v1172, %v1168
    %v1369 = vpack.c.b16 %v1173, %v1169
    %v1370 = vpack.c.b16 %v1174, %v1170
    %v1371 = vpack.c.b16 %v1175, %v1171
    %v1372 = vpack.c.b16 %v1180, %v1176
    %v1373 = vpack.c.b16 %v1181, %v1177
    %v1374 = vpack.c.b16 %v1182, %v1178
    %v1375 = vpack.c.b16 %v1183, %v1179
    %v1376 = vpack.c.b16 %v1188, %v1184
    %v1377 = vpack.c.b16 %v1189, %v1185
    %v1378 = vpack.c.b16 %v1190, %v1186
    %v1379 = vpack.c.b16 %v1191, %v1187
    %v1380 = vpack.c.b16 %v1196, %v1192
    %v1381 = vpack.c.b16 %v1197, %v1193
    %v1382 = vpack.c.b16 %v1198, %v1194
    %v1383 = vpack.c.b16 %v1199, %v1195
    %v1384 = vpack.c.b16 %v1204, %v1200
    %v1385 = vpack.c.b16 %v1205, %v1201
    %v1386 = vpack.c.b16 %v1206, %v1202
    %v1387 = vpack.c.b16 %v1207, %v1203
    %v1388 = vpack.c.b16 %v1212, %v1208
    %v1389 = vpack.c.b16 %v1213, %v1209
    %v1390 = vpack.c.b16 %v1214, %v1210
    %v1391 = vpack.c.b16 %v1215, %v1211
    %v1392 = vpack.c.b16 %v1220, %v1216
    %v1393 = vpack.c.b16 %v1221, %v1217
    %v1394 = vpack.c.b16 %v1222, %v1218
    %v1395 = vpack.c.b16 %v1223, %v1219
    %v1396 = vpack.c.b16 %v1228, %v1224
    %v1397 = vpack.c.b16 %v1229, %v1225
    %v1398 = vpack.c.b16 %v1230, %v1226
    %v1399 = vpack.c.b16 %v1231, %v1227
    %v1400 = vpack.c.b16 %v1236, %v1232
    %v1401 = vpack.c.b16 %v1237, %v1233
    %v1402 = vpack.c.b16 %v1238, %v1234
    %v1403 = vpack.c.b16 %v1239, %v1235
    %v1404 = vpack.c.b16 %v1244, %v1240
    %v1405 = vpack.c.b16 %v1245, %v1241
    %v1406 = vpack.c.b16 %v1246, %v1242
    %v1407 = vpack.c.b16 %v1247, %v1243
    %1568 = vmatprep.subr.bf16.mxu0 %v1249
    %1569 = vmatpush1.bf16.msra.mxu0 %v1248
    %1570 = vmatprep.subr.bf16.mxu0 %v1253
    %1571 = vmatpush1.bf16.msra.mxu0 %v1252
    %1572 = vmatprep.subr.bf16.mxu0 %v1257
    %1573 = vmatpush1.bf16.msra.mxu0 %v1256
    %1574 = vmatprep.subr.bf16.mxu0 %v1261
    %1575 = vmatpush1.bf16.msra.mxu0 %v1260
    %1576 = vmatprep.subr.bf16.mxu0 %v1265
    %1577 = vmatpush1.bf16.msra.mxu0 %v1264
    %1578 = vmatprep.subr.bf16.mxu0 %v1269
    %1579 = vmatpush1.bf16.msra.mxu0 %v1268
    %1580 = vmatprep.subr.bf16.mxu0 %v1273
    %1581 = vmatpush1.bf16.msra.mxu0 %v1272
    %1582 = vmatprep.subr.bf16.mxu0 %v1277
    %1583 = vmatpush1.bf16.msra.mxu0 %v1276
    %1584 = vmatprep.subr.bf16.mxu0 %v1281
    %1585 = vmatpush1.bf16.msra.mxu0 %v1280
    %1586 = vmatprep.subr.bf16.mxu0 %v1285
    %1587 = vmatpush1.bf16.msra.mxu0 %v1284
    %1588 = vmatprep.subr.bf16.mxu0 %v1289
    %1589 = vmatpush1.bf16.msra.mxu0 %v1288
    %1590 = vmatprep.subr.bf16.mxu0 %v1293
    %1591 = vmatpush1.bf16.msra.mxu0 %v1292
    %1592 = vmatprep.subr.bf16.mxu0 %v1297
    %1593 = vmatpush1.bf16.msra.mxu0 %v1296
    %1594 = vmatprep.subr.bf16.mxu0 %v1301
    %1595 = vmatpush1.bf16.msra.mxu0 %v1300
    %1596 = vmatprep.subr.bf16.mxu0 %v1305
    %1597 = vmatpush1.bf16.msra.mxu0 %v1304
    %1598 = vmatprep.subr.bf16.mxu0 %v1309
    %1599 = vmatpush1.bf16.msra.mxu0 %v1308
    %1600 = vmatprep.mubr.bf16.mxu0 %v577
    %1601 = vmatmul.mubr.bf16.gmra.mrb[0].mxu0 %v576
    %v1602 = vpop.f32.mrb[0].mxu0
    %v1603 = vadd.f32 %v751, %v1602
    %v1604 = vpop.f32.mrb[0].mxu0
    %v1605 = vadd.f32 %v755, %v1604
    %v1606 = vpop.f32.mrb[0].mxu0
    %v1607 = vadd.f32 %v751, %v1606
    %v1608 = vpop.f32.mrb[0].mxu0
    %v1609 = vadd.f32 %v755, %v1608
    %1610 = vmatprep.mubr.bf16.mxu0 %v582
    %1611 = vmatmul.mubr.bf16.gmra.mrb[0].mxu0 %v581
    %v1612 = vpop.f32.mrb[0].mxu0
    %v1613 = vadd.f32 %v751, %v1612
    %v1614 = vpop.f32.mrb[0].mxu0
    %v1615 = vadd.f32 %v755, %v1614
    %v1616 = vpop.f32.mrb[0].mxu0
    %v1617 = vadd.f32 %v751, %v1616
    %v1618 = vpop.f32.mrb[0].mxu0
    %v1619 = vadd.f32 %v755, %v1618
    %1620 = vdwg.mxu0
    %1621 = vmatprep.subr.bf16.mxu0 %v1313
    %1622 = vmatpush1.bf16.msra.mxu0 %v1312
    %1623 = vmatprep.subr.bf16.mxu0 %v1317
    %1624 = vmatpush1.bf16.msra.mxu0 %v1316
    %1625 = vmatprep.subr.bf16.mxu0 %v1321
    %1626 = vmatpush1.bf16.msra.mxu0 %v1320
    %1627 = vmatprep.subr.bf16.mxu0 %v1325
    %1628 = vmatpush1.bf16.msra.mxu0 %v1324
    %1629 = vmatprep.subr.bf16.mxu0 %v1329
    %1630 = vmatpush1.bf16.msra.mxu0 %v1328
    %1631 = vmatprep.subr.bf16.mxu0 %v1333
    %1632 = vmatpush1.bf16.msra.mxu0 %v1332
    %1633 = vmatprep.subr.bf16.mxu0 %v1337
    %1634 = vmatpush1.bf16.msra.mxu0 %v1336
    %1635 = vmatprep.subr.bf16.mxu0 %v1341
    %1636 = vmatpush1.bf16.msra.mxu0 %v1340
    %1637 = vmatprep.subr.bf16.mxu0 %v1345
    %1638 = vmatpush1.bf16.msra.mxu0 %v1344
    %1639 = vmatprep.subr.bf16.mxu0 %v1349
    %1640 = vmatpush1.bf16.msra.mxu0 %v1348
    %1641 = vmatprep.subr.bf16.mxu0 %v1353
    %1642 = vmatpush1.bf16.msra.mxu0 %v1352
    %1643 = vmatprep.subr.bf16.mxu0 %v1357
    %1644 = vmatpush1.bf16.msra.mxu0 %v1356
    %1645 = vmatprep.subr.bf16.mxu0 %v1361
    %1646 = vmatpush1.bf16.msra.mxu0 %v1360
    %1647 = vmatprep.subr.bf16.mxu0 %v1365
    %1648 = vmatpush1.bf16.msra.mxu0 %v1364
    %1649 = vmatprep.subr.bf16.mxu0 %v1369
    %1650 = vmatpush1.bf16.msra.mxu0 %v1368
    %1651 = vmatprep.subr.bf16.mxu0 %v1373
    %1652 = vmatpush1.bf16.msra.mxu0 %v1372
    %1653 = vmatprep.mubr.bf16.mxu0 %v579
    %1654 = vmatmul.mubr.bf16.gmra.mrb[0].mxu0 %v578
    %v1655 = vpop.f32.mrb[0].mxu0
    %v1656 = vadd.f32 %v1603, %v1655
    %v1657 = vpop.f32.mrb[0].mxu0
    %v1658 = vadd.f32 %v1605, %v1657
    %v1659 = vpop.f32.mrb[0].mxu0
    %v1660 = vadd.f32 %v1607, %v1659
    %v1661 = vpop.f32.mrb[0].mxu0
    %v1662 = vadd.f32 %v1609, %v1661
    %1663 = vmatprep.mubr.bf16.mxu0 %v584
    %1664 = vmatmul.mubr.bf16.gmra.mrb[0].mxu0 %v583
    %v1665 = vpop.f32.mrb[0].mxu0
    %v1666 = vadd.f32 %v1613, %v1665
    %v1667 = vpop.f32.mrb[0].mxu0
    %v1668 = vadd.f32 %v1615, %v1667
    %v1669 = vpop.f32.mrb[0].mxu0
    %v1670 = vadd.f32 %v1617, %v1669
    %v1671 = vpop.f32.mrb[0].mxu0
    %v1672 = vadd.f32 %v1619, %v1671
    %1673 = vdwg.mxu0
    %1674 = vmatprep.subr.bf16.mxu0 %v1377
    %1675 = vmatpush1.bf16.msra.mxu0 %v1376
    %1676 = vmatprep.subr.bf16.mxu0 %v1381
    %1677 = vmatpush1.bf16.msra.mxu0 %v1380
    %1678 = vmatprep.subr.bf16.mxu0 %v1385
    %1679 = vmatpush1.bf16.msra.mxu0 %v1384
    %1680 = vmatprep.subr.bf16.mxu0 %v1389
    %1681 = vmatpush1.bf16.msra.mxu0 %v1388
    %1682 = vmatprep.subr.bf16.mxu0 %v1393
    %1683 = vmatpush1.bf16.msra.mxu0 %v1392
    %1684 = vmatprep.subr.bf16.mxu0 %v1397
    %1685 = vmatpush1.bf16.msra.mxu0 %v1396
    %1686 = vmatprep.subr.bf16.mxu0 %v1401
    %1687 = vmatpush1.bf16.msra.mxu0 %v1400
    %1688 = vmatprep.subr.bf16.mxu0 %v1405
    %1689 = vmatpush1.bf16.msra.mxu0 %v1404
    %1690 = vmatprep.subr.bf16.mxu0 0
    %1691 = vmatpush1.bf16.msra.mxu0 0
    %1692 = vmatprep.subr.bf16.mxu0 0
    %1693 = vmatpush1.bf16.msra.mxu0 0
    %1694 = vmatprep.subr.bf16.mxu0 0
    %1695 = vmatpush1.bf16.msra.mxu0 0
    %1696 = vmatprep.subr.bf16.mxu0 0
    %1697 = vmatpush1.bf16.msra.mxu0 0
    %1698 = vmatprep.subr.bf16.mxu0 0
    %1699 = vmatpush1.bf16.msra.mxu0 0
    %1700 = vmatprep.subr.bf16.mxu0 0
    %1701 = vmatpush1.bf16.msra.mxu0 0
    %1702 = vmatprep.subr.bf16.mxu0 0
    %1703 = vmatpush1.bf16.msra.mxu0 0
    %1704 = vmatprep.subr.bf16.mxu0 0
    %1705 = vmatpush1.bf16.msra.mxu0 0
    %1706 = vmatprep.mubr.bf16.mxu0 0
    %1707 = vmatmul.mubr.bf16.gmra.mrb[0].mxu0 %v580
    %v1708 = vpop.f32.mrb[0].mxu0
    %v1709 = vadd.f32 %v1656, %v1708
    %v1710 = vpop.f32.mrb[0].mxu0
    %v1711 = vadd.f32 %v1658, %v1710
    %v1712 = vpop.f32.mrb[0].mxu0
    %v1713 = vadd.f32 %v1660, %v1712
    %v1714 = vpop.f32.mrb[0].mxu0
    %v1715 = vadd.f32 %v1662, %v1714
    %1716 = vmatprep.mubr.bf16.mxu0 0
    %1717 = vmatmul.mubr.bf16.gmra.mrb[0].mxu0 %v585
    %v1718 = vpop.f32.mrb[0].mxu0
    %v1719 = vadd.f32 %v1666, %v1718
    %v1720 = vpop.f32.mrb[0].mxu0
    %v1721 = vadd.f32 %v1668, %v1720
    %v1722 = vpop.f32.mrb[0].mxu0
    %v1723 = vadd.f32 %v1670, %v1722
    %v1724 = vpop.f32.mrb[0].mxu0
    %v1725 = vadd.f32 %v1672, %v1724
    %1726 = vdwg.mxu0
    %1727 = vmatprep.subr.bf16.mxu0 %v1251
    %1728 = vmatpush1.bf16.msra.mxu0 %v1250
    %1729 = vmatprep.subr.bf16.mxu0 %v1255
    %1730 = vmatpush1.bf16.msra.mxu0 %v1254
    %1731 = vmatprep.subr.bf16.mxu0 %v1259
    %1732 = vmatpush1.bf16.msra.mxu0 %v1258
    %1733 = vmatprep.subr.bf16.mxu0 %v1263
    %1734 = vmatpush1.bf16.msra.mxu0 %v1262
    %1735 = vmatprep.subr.bf16.mxu0 %v1267
    %1736 = vmatpush1.bf16.msra.mxu0 %v1266
    %1737 = vmatprep.subr.bf16.mxu0 %v1271
    %1738 = vmatpush1.bf16.msra.mxu0 %v1270
    %1739 = vmatprep.subr.bf16.mxu0 %v1275
    %1740 = vmatpush1.bf16.msra.mxu0 %v1274
    %1741 = vmatprep.subr.bf16.mxu0 %v1279
    %1742 = vmatpush1.bf16.msra.mxu0 %v1278
    %1743 = vmatprep.subr.bf16.mxu0 %v1283
    %1744 = vmatpush1.bf16.msra.mxu0 %v1282
    %1745 = vmatprep.subr.bf16.mxu0 %v1287
    %1746 = vmatpush1.bf16.msra.mxu0 %v1286
    %1747 = vmatprep.subr.bf16.mxu0 %v1291
    %1748 = vmatpush1.bf16.msra.mxu0 %v1290
    %1749 = vmatprep.subr.bf16.mxu0 %v1295
    %1750 = vmatpush1.bf16.msra.mxu0 %v1294
    %1751 = vmatprep.subr.bf16.mxu0 %v1299
    %1752 = vmatpush1.bf16.msra.mxu0 %v1298
    %1753 = vmatprep.subr.bf16.mxu0 %v1303
    %1754 = vmatpush1.bf16.msra.mxu0 %v1302
    %1755 = vmatprep.subr.bf16.mxu0 %v1307
    %1756 = vmatpush1.bf16.msra.mxu0 %v1306
    %1757 = vmatprep.subr.bf16.mxu0 %v1311
    %1758 = vmatpush1.bf16.msra.mxu0 %v1310
    %1759 = vmatprep.mubr.bf16.mxu0 %v577
    %1760 = vmatmul.mubr.bf16.gmra.mrb[0].mxu0 %v576
    %v1761 = vpop.f32.mrb[0].mxu0
    %v1762 = vadd.f32 %v759, %v1761
    %v1763 = vpop.f32.mrb[0].mxu0
    %v1764 = vadd.f32 %v763, %v1763
    %v1765 = vpop.f32.mrb[0].mxu0
    %v1766 = vadd.f32 %v759, %v1765
    %v1767 = vpop.f32.mrb[0].mxu0
    %v1768 = vadd.f32 %v763, %v1767
    %1769 = vmatprep.mubr.bf16.mxu0 %v582
    %1770 = vmatmul.mubr.bf16.gmra.mrb[0].mxu0 %v581
    %v1771 = vpop.f32.mrb[0].mxu0
    %v1772 = vadd.f32 %v759, %v1771
    %v1773 = vpop.f32.mrb[0].mxu0
    %v1774 = vadd.f32 %v763, %v1773
    %v1775 = vpop.f32.mrb[0].mxu0
    %v1776 = vadd.f32 %v759, %v1775
    %v1777 = vpop.f32.mrb[0].mxu0
    %v1778 = vadd.f32 %v763, %v1777
    %1779 = vdwg.mxu0
    %1780 = vmatprep.subr.bf16.mxu0 %v1315
    %1781 = vmatpush1.bf16.msra.mxu0 %v1314
    %1782 = vmatprep.subr.bf16.mxu0 %v1319
    %1783 = vmatpush1.bf16.msra.mxu0 %v1318
    %1784 = vmatprep.subr.bf16.mxu0 %v1323
    %1785 = vmatpush1.bf16.msra.mxu0 %v1322
    %1786 = vmatprep.subr.bf16.mxu0 %v1327
    %1787 = vmatpush1.bf16.msra.mxu0 %v1326
    %1788 = vmatprep.subr.bf16.mxu0 %v1331
    %1789 = vmatpush1.bf16.msra.mxu0 %v1330
    %1790 = vmatprep.subr.bf16.mxu0 %v1335
    %1791 = vmatpush1.bf16.msra.mxu0 %v1334
    %1792 = vmatprep.subr.bf16.mxu0 %v1339
    %1793 = vmatpush1.bf16.msra.mxu0 %v1338
    %1794 = vmatprep.subr.bf16.mxu0 %v1343
    %1795 = vmatpush1.bf16.msra.mxu0 %v1342
    %1796 = vmatprep.subr.bf16.mxu0 %v1347
    %1797 = vmatpush1.bf16.msra.mxu0 %v1346
    %1798 = vmatprep.subr.bf16.mxu0 %v1351
    %1799 = vmatpush1.bf16.msra.mxu0 %v1350
    %1800 = vmatprep.subr.bf16.mxu0 %v1355
    %1801 = vmatpush1.bf16.msra.mxu0 %v1354
    %1802 = vmatprep.subr.bf16.mxu0 %v1359
    %1803 = vmatpush1.bf16.msra.mxu0 %v1358
    %1804 = vmatprep.subr.bf16.mxu0 %v1363
    %1805 = vmatpush1.bf16.msra.mxu0 %v1362
    %1806 = vmatprep.subr.bf16.mxu0 %v1367
    %1807 = vmatpush1.bf16.msra.mxu0 %v1366
    %1808 = vmatprep.subr.bf16.mxu0 %v1371
    %1809 = vmatpush1.bf16.msra.mxu0 %v1370
    %1810 = vmatprep.subr.bf16.mxu0 %v1375
    %1811 = vmatpush1.bf16.msra.mxu0 %v1374
    %1812 = vmatprep.mubr.bf16.mxu0 %v579
    %1813 = vmatmul.mubr.bf16.gmra.mrb[0].mxu0 %v578
    %v1814 = vpop.f32.mrb[0].mxu0
    %v1815 = vadd.f32 %v1762, %v1814
    %v1816 = vpop.f32.mrb[0].mxu0
    %v1817 = vadd.f32 %v1764, %v1816
    %v1818 = vpop.f32.mrb[0].mxu0
    %v1819 = vadd.f32 %v1766, %v1818
    %v1820 = vpop.f32.mrb[0].mxu0
    %v1821 = vadd.f32 %v1768, %v1820
    %1822 = vmatprep.mubr.bf16.mxu0 %v584
    %1823 = vmatmul.mubr.bf16.gmra.mrb[0].mxu0 %v583
    %v1824 = vpop.f32.mrb[0].mxu0
    %v1825 = vadd.f32 %v1772, %v1824
    %v1826 = vpop.f32.mrb[0].mxu0
    %v1827 = vadd.f32 %v1774, %v1826
    %v1828 = vpop.f32.mrb[0].mxu0
    %v1829 = vadd.f32 %v1776, %v1828
    %v1830 = vpop.f32.mrb[0].mxu0
    %v1831 = vadd.f32 %v1778, %v1830
    %1832 = vdwg.mxu0
    %1833 = vmatprep.subr.bf16.mxu0 %v1379
    %1834 = vmatpush1.bf16.msra.mxu0 %v1378
    %1835 = vmatprep.subr.bf16.mxu0 %v1383
    %1836 = vmatpush1.bf16.msra.mxu0 %v1382
    %1837 = vmatprep.subr.bf16.mxu0 %v1387
    %1838 = vmatpush1.bf16.msra.mxu0 %v1386
    %1839 = vmatprep.subr.bf16.mxu0 %v1391
    %1840 = vmatpush1.bf16.msra.mxu0 %v1390
    %1841 = vmatprep.subr.bf16.mxu0 %v1395
    %1842 = vmatpush1.bf16.msra.mxu0 %v1394
    %1843 = vmatprep.subr.bf16.mxu0 %v1399
    %1844 = vmatpush1.bf16.msra.mxu0 %v1398
    %1845 = vmatprep.subr.bf16.mxu0 %v1403
    %1846 = vmatpush1.bf16.msra.mxu0 %v1402
    %1847 = vmatprep.subr.bf16.mxu0 %v1407
    %1848 = vmatpush1.bf16.msra.mxu0 %v1406
    %1849 = vmatprep.subr.bf16.mxu0 0
    %1850 = vmatpush1.bf16.msra.mxu0 0
    %1851 = vmatprep.subr.bf16.mxu0 0
    %1852 = vmatpush1.bf16.msra.mxu0 0
    %1853 = vmatprep.subr.bf16.mxu0 0
    %1854 = vmatpush1.bf16.msra.mxu0 0
    %1855 = vmatprep.subr.bf16.mxu0 0
    %1856 = vmatpush1.bf16.msra.mxu0 0
    %1857 = vmatprep.subr.bf16.mxu0 0
    %1858 = vmatpush1.bf16.msra.mxu0 0
    %1859 = vmatprep.subr.bf16.mxu0 0
    %1860 = vmatpush1.bf16.msra.mxu0 0
    %1861 = vmatprep.subr.bf16.mxu0 0
    %1862 = vmatpush1.bf16.msra.mxu0 0
    %1863 = vmatprep.subr.bf16.mxu0 0
    %1864 = vmatpush1.bf16.msra.mxu0 0
    %1865 = vmatprep.mubr.bf16.mxu0 0
    %1866 = vmatmul.mubr.bf16.gmra.mrb[0].mxu0 %v580
    %v1867 = vpop.f32.mrb[0].mxu0
    %v1868 = vadd.f32 %v1815, %v1867
    %v1869 = vpop.f32.mrb[0].mxu0
    %v1870 = vadd.f32 %v1817, %v1869
    %v1871 = vpop.f32.mrb[0].mxu0
    %v1872 = vadd.f32 %v1819, %v1871
    %v1873 = vpop.f32.mrb[0].mxu0
    %v1874 = vadd.f32 %v1821, %v1873
    %1875 = vmatprep.mubr.bf16.mxu0 0
    %1876 = vmatmul.mubr.bf16.gmra.mrb[0].mxu0 %v585
    %v1877 = vpop.f32.mrb[0].mxu0
    %v1878 = vadd.f32 %v1825, %v1877
    %v1879 = vpop.f32.mrb[0].mxu0
    %v1880 = vadd.f32 %v1827, %v1879
    %v1881 = vpop.f32.mrb[0].mxu0
    %v1882 = vadd.f32 %v1829, %v1881
    %v1883 = vpop.f32.mrb[0].mxu0
    %v1884 = vadd.f32 %v1831, %v1883
    %1885 = vdwg.mxu0
    %v1886 = vmax.f32 %v1709, 0.0
    %v1887 = vmax.f32 %v1711, 0.0
    %v1888 = vmax.f32 %v1868, 0.0
    %v1889 = vmax.f32 %v1870, 0.0
    %v1890 = vmax.f32 %v1713, 0.0
    %v1891 = vmax.f32 %v1715, 0.0
    %v1892 = vmax.f32 %v1872, 0.0
    %v1893 = vmax.f32 %v1874, 0.0
    %v1894 = vmax.f32 %v1719, 0.0
    %v1895 = vmax.f32 %v1721, 0.0
    %v1896 = vmax.f32 %v1878, 0.0
    %v1897 = vmax.f32 %v1880, 0.0
    %v1898 = vmax.f32 %v1723, 0.0
    %v1899 = vmax.f32 %v1725, 0.0
    %v1900 = vmax.f32 %v1882, 0.0
    %v1901 = vmax.f32 %v1884, 0.0
    %v1902 = vpack.c.bf16 %v1890, %v1886
    %v1903 = vpack.c.bf16 %v1891, %v1887
    %v1904 = vpack.c.bf16 %v1892, %v1888
    %v1905 = vpack.c.bf16 %v1893, %v1889
    %v1906 = vpack.c.bf16 %v1898, %v1894
    %v1907 = vpack.c.bf16 %v1899, %v1895
    %v1908 = vpack.c.bf16 %v1900, %v1896
    %v1909 = vpack.c.bf16 %v1901, %v1897
    %v1910 = vld [vmem:[#allocation8] sm:$0xf]
    %v1911 = vld [vmem:[#allocation8 + $0x4] sm:$0xf]
    %v1912 = vld [vmem:[#allocation8 + $0x8] sm:$0xf]
    %v1913 = vld [vmem:[#allocation8 + $0xc] sm:$0xf]
    %v1914 = vld [vmem:[#allocation8 + $0x10] sm:$0xf]
    %v1915 = vld [vmem:[#allocation8 + $0x14] sm:$0xf]
    %v1916 = vld [vmem:[#allocation8 + $0x18] sm:$0xf]
    %v1917 = vld [vmem:[#allocation8 + $0x1c] sm:$0xf]
    %v1918 = vld [vmem:[#allocation8 + $0x20] sm:$0xf]
    %v1919 = vld [vmem:[#allocation8 + $0x24] sm:$0xf]
    %v1920 = vld [vmem:[#allocation8 + $0x28] sm:$0xf]
    %v1921 = vld [vmem:[#allocation8 + $0x2c] sm:$0xf]
    %v1922 = vld [vmem:[#allocation8 + $0x30] sm:$0xf]
    %v1923 = vld [vmem:[#allocation8 + $0x34] sm:$0xf]
    %v1924 = vld [vmem:[#allocation8 + $0x38] sm:$0xf]
    %v1925 = vld [vmem:[#allocation8 + $0x3c] sm:$0xf]
    %v1926 = vld [vmem:[#allocation8 + $0x40] sm:$0xf]
    %v1927 = vld [vmem:[#allocation8 + $0x44] sm:$0xf]
    %v1928 = vld [vmem:[#allocation8 + $0x48] sm:$0xf]
    %v1929 = vld [vmem:[#allocation8 + $0x4c] sm:$0xf]
    %v1930 = vld [vmem:[#allocation8 + $0x50] sm:$0xf]
    %v1931 = vld [vmem:[#allocation8 + $0x54] sm:$0xf]
    %v1932 = vld [vmem:[#allocation8 + $0x58] sm:$0xf]
    %v1933 = vld [vmem:[#allocation8 + $0x5c] sm:$0xf]
    %v1934 = vld [vmem:[#allocation8 + $0x60] sm:$0xf]
    %v1935 = vld [vmem:[#allocation8 + $0x64] sm:$0xf]
    %v1936 = vld [vmem:[#allocation8 + $0x68] sm:$0xf]
    %v1937 = vld [vmem:[#allocation8 + $0x6c] sm:$0xf]
    %v1938 = vld [vmem:[#allocation8 + $0x70] sm:$0xf]
    %v1939 = vld [vmem:[#allocation8 + $0x74] sm:$0xf]
    %v1940 = vld [vmem:[#allocation8 + $0x78] sm:$0xf]
    %v1941 = vld [vmem:[#allocation8 + $0x7c] sm:$0xf]
    %v1942 = vld [vmem:[#allocation8 + $0x80] sm:$0xf]
    %v1943 = vld [vmem:[#allocation8 + $0x84] sm:$0xf]
    %v1944 = vld [vmem:[#allocation8 + $0x88] sm:$0xf]
    %v1945 = vld [vmem:[#allocation8 + $0x8c] sm:$0xf]
    %v1946 = vld [vmem:[#allocation8 + $0x90] sm:$0xf]
    %v1947 = vld [vmem:[#allocation8 + $0x94] sm:$0xf]
    %v1948 = vld [vmem:[#allocation8 + $0x98] sm:$0xf]
    %v1949 = vld [vmem:[#allocation8 + $0x9c] sm:$0xf]
    %v1950 = vld [vmem:[#allocation8 + $0xa0] sm:$0xf]
    %v1951 = vld [vmem:[#allocation8 + $0xa4] sm:$0xf]
    %v1952 = vld [vmem:[#allocation8 + $0xa8] sm:$0xf]
    %v1953 = vld [vmem:[#allocation8 + $0xac] sm:$0xf]
    %v1954 = vld [vmem:[#allocation8 + $0xb0] sm:$0xf]
    %v1955 = vld [vmem:[#allocation8 + $0xb4] sm:$0xf]
    %v1956 = vld [vmem:[#allocation8 + $0xb8] sm:$0xf]
    %v1957 = vld [vmem:[#allocation8 + $0xbc] sm:$0xf]
    %v1958 = vld [vmem:[#allocation8 + $0xc0] sm:$0xf]
    %v1959 = vld [vmem:[#allocation8 + $0xc4] sm:$0xf]
    %v1960 = vld [vmem:[#allocation8 + $0xc8] sm:$0xf]
    %v1961 = vld [vmem:[#allocation8 + $0xcc] sm:$0xf]
    %v1962 = vld [vmem:[#allocation8 + $0xd0] sm:$0xf]
    %v1963 = vld [vmem:[#allocation8 + $0xd4] sm:$0xf]
    %v1964 = vld [vmem:[#allocation8 + $0xd8] sm:$0xf]
    %v1965 = vld [vmem:[#allocation8 + $0xdc] sm:$0xf]
    %v1966 = vld [vmem:[#allocation8 + $0xe0] sm:$0xf]
    %v1967 = vld [vmem:[#allocation8 + $0xe4] sm:$0xf]
    %v1968 = vld [vmem:[#allocation8 + $0xe8] sm:$0xf]
    %v1969 = vld [vmem:[#allocation8 + $0xec] sm:$0xf]
    %v1970 = vld [vmem:[#allocation8 + $0xf0] sm:$0xf]
    %v1971 = vld [vmem:[#allocation8 + $0xf4] sm:$0xf]
    %v1972 = vld [vmem:[#allocation8 + $0xf8] sm:$0xf]
    %v1973 = vld [vmem:[#allocation8 + $0xfc] sm:$0xf]
    %v1974 = vld [vmem:[%s6] sm:$0x1]
    %v1976 = vlaneseq
    %v1977 = vshrl.u32 %v1976, 7
    %v1978 = vsub.s32 0, %v1977
    %v1979 = vrot.slane %v1974, %v1978
    %v2045 = vunpack.c.l.b16 %v1910
    %v2046 = vunpack.c.l.b16 %v1911
    %v2047 = vunpack.c.l.b16 %v1912
    %v2048 = vunpack.c.l.b16 %v1913
    %v2049 = vunpack.c.l.b16 %v1914
    %v2050 = vunpack.c.l.b16 %v1915
    %v2051 = vunpack.c.l.b16 %v1916
    %v2052 = vunpack.c.l.b16 %v1917
    %v2053 = vunpack.c.l.b16 %v1918
    %v2054 = vunpack.c.l.b16 %v1919
    %v2055 = vunpack.c.l.b16 %v1920
    %v2056 = vunpack.c.l.b16 %v1921
    %v2057 = vunpack.c.l.b16 %v1922
    %v2058 = vunpack.c.l.b16 %v1923
    %v2059 = vunpack.c.l.b16 %v1924
    %v2060 = vunpack.c.l.b16 %v1925
    %v2061 = vunpack.c.l.b16 %v1926
    %v2062 = vunpack.c.l.b16 %v1927
    %v2063 = vunpack.c.l.b16 %v1928
    %v2064 = vunpack.c.l.b16 %v1929
    %v2065 = vunpack.c.l.b16 %v1930
    %v2066 = vunpack.c.l.b16 %v1931
    %v2067 = vunpack.c.l.b16 %v1932
    %v2068 = vunpack.c.l.b16 %v1933
    %v2069 = vunpack.c.l.b16 %v1934
    %v2070 = vunpack.c.l.b16 %v1935
    %v2071 = vunpack.c.l.b16 %v1936
    %v2072 = vunpack.c.l.b16 %v1937
    %v2073 = vunpack.c.l.b16 %v1938
    %v2074 = vunpack.c.l.b16 %v1939
    %v2075 = vunpack.c.l.b16 %v1940
    %v2076 = vunpack.c.l.b16 %v1941
    %v2077 = vunpack.c.l.b16 %v1942
    %v2078 = vunpack.c.l.b16 %v1943
    %v2079 = vunpack.c.l.b16 %v1944
    %v2080 = vunpack.c.l.b16 %v1945
    %v2081 = vunpack.c.l.b16 %v1946
    %v2082 = vunpack.c.l.b16 %v1947
    %v2083 = vunpack.c.l.b16 %v1948
    %v2084 = vunpack.c.l.b16 %v1949
    %v2085 = vunpack.c.l.b16 %v1950
    %v2086 = vunpack.c.l.b16 %v1951
    %v2087 = vunpack.c.l.b16 %v1952
    %v2088 = vunpack.c.l.b16 %v1953
    %v2089 = vunpack.c.l.b16 %v1954
    %v2090 = vunpack.c.l.b16 %v1955
    %v2091 = vunpack.c.l.b16 %v1956
    %v2092 = vunpack.c.l.b16 %v1957
    %v2093 = vunpack.c.l.b16 %v1958
    %v2094 = vunpack.c.l.b16 %v1959
    %v2095 = vunpack.c.l.b16 %v1960
    %v2096 = vunpack.c.l.b16 %v1961
    %v2097 = vunpack.c.l.b16 %v1962
    %v2098 = vunpack.c.l.b16 %v1963
    %v2099 = vunpack.c.l.b16 %v1964
    %v2100 = vunpack.c.l.b16 %v1965
    %v2101 = vunpack.c.l.b16 %v1966
    %v2102 = vunpack.c.l.b16 %v1967
    %v2103 = vunpack.c.l.b16 %v1968
    %v2104 = vunpack.c.l.b16 %v1969
    %v2105 = vunpack.c.l.b16 %v1970
    %v2106 = vunpack.c.l.b16 %v1971
    %v2107 = vunpack.c.l.b16 %v1972
    %v2108 = vunpack.c.l.b16 %v1973
    %v2109 = vpack.c.b16 %v2046, %v2045
    %v2110 = vpack.c.b16 %v2048, %v2047
    %v2111 = vpack.c.b16 %v2050, %v2049
    %v2112 = vpack.c.b16 %v2052, %v2051
    %v2113 = vpack.c.b16 %v2054, %v2053
    %v2114 = vpack.c.b16 %v2056, %v2055
    %v2115 = vpack.c.b16 %v2058, %v2057
    %v2116 = vpack.c.b16 %v2060, %v2059
    %v2117 = vpack.c.b16 %v2062, %v2061
    %v2118 = vpack.c.b16 %v2064, %v2063
    %v2119 = vpack.c.b16 %v2066, %v2065
    %v2120 = vpack.c.b16 %v2068, %v2067
    %v2121 = vpack.c.b16 %v2070, %v2069
    %v2122 = vpack.c.b16 %v2072, %v2071
    %v2123 = vpack.c.b16 %v2074, %v2073
    %v2124 = vpack.c.b16 %v2076, %v2075
    %v2125 = vpack.c.b16 %v2078, %v2077
    %v2126 = vpack.c.b16 %v2080, %v2079
    %v2127 = vpack.c.b16 %v2082, %v2081
    %v2128 = vpack.c.b16 %v2084, %v2083
    %v2129 = vpack.c.b16 %v2086, %v2085
    %v2130 = vpack.c.b16 %v2088, %v2087
    %v2131 = vpack.c.b16 %v2090, %v2089
    %v2132 = vpack.c.b16 %v2092, %v2091
    %v2133 = vpack.c.b16 %v2094, %v2093
    %v2134 = vpack.c.b16 %v2096, %v2095
    %v2135 = vpack.c.b16 %v2098, %v2097
    %v2136 = vpack.c.b16 %v2100, %v2099
    %v2137 = vpack.c.b16 %v2102, %v2101
    %v2138 = vpack.c.b16 %v2104, %v2103
    %v2139 = vpack.c.b16 %v2106, %v2105
    %v2140 = vpack.c.b16 %v2108, %v2107
    %2173 = vmatprep.subr.bf16.mxu0 0
    %2174 = vmatpush1.bf16.msra.mxu0 %v2109
    %2175 = vmatprep.subr.bf16.mxu0 0
    %2176 = vmatpush1.bf16.msra.mxu0 %v2110
    %2177 = vmatprep.subr.bf16.mxu0 0
    %2178 = vmatpush1.bf16.msra.mxu0 %v2111
    %2179 = vmatprep.subr.bf16.mxu0 0
    %2180 = vmatpush1.bf16.msra.mxu0 %v2112
    %2181 = vmatprep.subr.bf16.mxu0 0
    %2182 = vmatpush1.bf16.msra.mxu0 %v2113
    %2183 = vmatprep.subr.bf16.mxu0 0
    %2184 = vmatpush1.bf16.msra.mxu0 %v2114
    %2185 = vmatprep.subr.bf16.mxu0 0
    %2186 = vmatpush1.bf16.msra.mxu0 %v2115
    %2187 = vmatprep.subr.bf16.mxu0 0
    %2188 = vmatpush1.bf16.msra.mxu0 %v2116
    %2189 = vmatprep.subr.bf16.mxu0 0
    %2190 = vmatpush1.bf16.msra.mxu0 %v2117
    %2191 = vmatprep.subr.bf16.mxu0 0
    %2192 = vmatpush1.bf16.msra.mxu0 %v2118
    %2193 = vmatprep.subr.bf16.mxu0 0
    %2194 = vmatpush1.bf16.msra.mxu0 %v2119
    %2195 = vmatprep.subr.bf16.mxu0 0
    %2196 = vmatpush1.bf16.msra.mxu0 %v2120
    %2197 = vmatprep.subr.bf16.mxu0 0
    %2198 = vmatpush1.bf16.msra.mxu0 %v2121
    %2199 = vmatprep.subr.bf16.mxu0 0
    %2200 = vmatpush1.bf16.msra.mxu0 %v2122
    %2201 = vmatprep.subr.bf16.mxu0 0
    %2202 = vmatpush1.bf16.msra.mxu0 %v2123
    %2203 = vmatprep.subr.bf16.mxu0 0
    %2204 = vmatpush1.bf16.msra.mxu0 %v2124
    %2205 = vmatprep.mubr.bf16.mxu0 %v1903
    %2206 = vmatmul.mubr.bf16.gmra.mrb[0].mxu0 %v1902
    %v2207 = vpop.f32.mrb[0].mxu0
    %v2208 = vadd.f32 %v1979, %v2207
    %v2209 = vpop.f32.mrb[0].mxu0
    %v2210 = vpop.f32.mrb[0].mxu0
    %v2211 = vadd.f32 %v1979, %v2210
    %v2212 = vpop.f32.mrb[0].mxu0
    %2213 = vmatprep.mubr.bf16.mxu0 %v1907
    %2214 = vmatmul.mubr.bf16.gmra.mrb[0].mxu0 %v1906
    %v2215 = vpop.f32.mrb[0].mxu0
    %v2216 = vadd.f32 %v1979, %v2215
    %v2217 = vpop.f32.mrb[0].mxu0
    %v2218 = vpop.f32.mrb[0].mxu0
    %v2219 = vadd.f32 %v1979, %v2218
    %v2220 = vpop.f32.mrb[0].mxu0
    %2221 = vdwg.mxu0
    %2222 = vmatprep.subr.bf16.mxu0 0
    %2223 = vmatpush1.bf16.msra.mxu0 %v2125
    %2224 = vmatprep.subr.bf16.mxu0 0
    %2225 = vmatpush1.bf16.msra.mxu0 %v2126
    %2226 = vmatprep.subr.bf16.mxu0 0
    %2227 = vmatpush1.bf16.msra.mxu0 %v2127
    %2228 = vmatprep.subr.bf16.mxu0 0
    %2229 = vmatpush1.bf16.msra.mxu0 %v2128
    %2230 = vmatprep.subr.bf16.mxu0 0
    %2231 = vmatpush1.bf16.msra.mxu0 %v2129
    %2232 = vmatprep.subr.bf16.mxu0 0
    %2233 = vmatpush1.bf16.msra.mxu0 %v2130
    %2234 = vmatprep.subr.bf16.mxu0 0
    %2235 = vmatpush1.bf16.msra.mxu0 %v2131
    %2236 = vmatprep.subr.bf16.mxu0 0
    %2237 = vmatpush1.bf16.msra.mxu0 %v2132
    %2238 = vmatprep.subr.bf16.mxu0 0
    %2239 = vmatpush1.bf16.msra.mxu0 %v2133
    %2240 = vmatprep.subr.bf16.mxu0 0
    %2241 = vmatpush1.bf16.msra.mxu0 %v2134
    %2242 = vmatprep.subr.bf16.mxu0 0
    %2243 = vmatpush1.bf16.msra.mxu0 %v2135
    %2244 = vmatprep.subr.bf16.mxu0 0
    %2245 = vmatpush1.bf16.msra.mxu0 %v2136
    %2246 = vmatprep.subr.bf16.mxu0 0
    %2247 = vmatpush1.bf16.msra.mxu0 %v2137
    %2248 = vmatprep.subr.bf16.mxu0 0
    %2249 = vmatpush1.bf16.msra.mxu0 %v2138
    %2250 = vmatprep.subr.bf16.mxu0 0
    %2251 = vmatpush1.bf16.msra.mxu0 %v2139
    %2252 = vmatprep.subr.bf16.mxu0 0
    %2253 = vmatpush1.bf16.msra.mxu0 %v2140
    %2254 = vmatprep.mubr.bf16.mxu0 %v1905
    %2255 = vmatmul.mubr.bf16.gmra.mrb[0].mxu0 %v1904
    %v2256 = vpop.f32.mrb[0].mxu0
    %v2257 = vadd.f32 %v2208, %v2256
    %v2258 = vpop.f32.mrb[0].mxu0
    %v2259 = vpop.f32.mrb[0].mxu0
    %v2260 = vadd.f32 %v2211, %v2259
    %v2261 = vpop.f32.mrb[0].mxu0
    %2262 = vmatprep.mubr.bf16.mxu0 %v1909
    %2263 = vmatmul.mubr.bf16.gmra.mrb[0].mxu0 %v1908
    %v2264 = vpop.f32.mrb[0].mxu0
    %v2265 = vadd.f32 %v2216, %v2264
    %v2266 = vpop.f32.mrb[0].mxu0
    %v2267 = vpop.f32.mrb[0].mxu0
    %v2268 = vadd.f32 %v2219, %v2267
    %v2269 = vpop.f32.mrb[0].mxu0
    %2270 = vdwg.mxu0
    %v2271 = vmax.f32 %v2257, 0.0
    %v2272 = vmax.f32 %v2260, 0.0
    %v2273 = vmax.f32 %v2265, 0.0
    %v2274 = vmax.f32 %v2268, 0.0
    %v2275 = vpack.c.bf16 %v2272, %v2271
    %v2276 = vpack.c.bf16 %v2274, %v2273
    %v2277 = vld [vmem:[#allocation10] sm:$0xf]
    %v2278 = vld [vmem:[#allocation10 + $0x4] sm:$0xf]
    %v2279 = vld [vmem:[#allocation10 + $0x8] sm:$0xf]
    %v2280 = vld [vmem:[#allocation10 + $0xc] sm:$0xf]
    %v2281 = vld [vmem:[#allocation10 + $0x10] sm:$0xf]
    %v2282 = vld [vmem:[#allocation10 + $0x14] sm:$0xf]
    %v2283 = vld [vmem:[#allocation10 + $0x18] sm:$0xf]
    %v2284 = vld [vmem:[#allocation10 + $0x1c] sm:$0xf]
    %v2285 = vld [vmem:[#allocation10 + $0x20] sm:$0xf]
    %v2286 = vld [vmem:[#allocation10 + $0x24] sm:$0xf]
    %v2287 = vld [vmem:[#allocation10 + $0x28] sm:$0xf]
    %v2288 = vld [vmem:[#allocation10 + $0x2c] sm:$0xf]
    %v2289 = vld [vmem:[#allocation10 + $0x30] sm:$0xf]
    %v2290 = vld [vmem:[#allocation10 + $0x34] sm:$0xf]
    %v2291 = vld [vmem:[#allocation10 + $0x38] sm:$0xf]
    %v2292 = vld [vmem:[#allocation10 + $0x3c] sm:$0xf]
    %v2293 = vld [vmem:[%s8] sm:$0x1]
    %v2295 = vlaneseq
    %v2296 = vshrl.u32 %v2295, 7
    %v2297 = vsub.s32 0, %v2296
    %v2298 = vrot.slane %v2293, %v2297
    %v2316 = vunpack.c.l.b16 %v2277
    %v2317 = vunpack.c.l.b16 %v2278
    %v2318 = vunpack.c.l.b16 %v2279
    %v2319 = vunpack.c.l.b16 %v2280
    %v2320 = vunpack.c.l.b16 %v2281
    %v2321 = vunpack.c.l.b16 %v2282
    %v2322 = vunpack.c.l.b16 %v2283
    %v2323 = vunpack.c.l.b16 %v2284
    %v2324 = vunpack.c.l.b16 %v2285
    %v2325 = vunpack.c.l.b16 %v2286
    %v2326 = vunpack.c.l.b16 %v2287
    %v2327 = vunpack.c.l.b16 %v2288
    %v2328 = vunpack.c.l.b16 %v2289
    %v2329 = vunpack.c.l.b16 %v2290
    %v2330 = vunpack.c.l.b16 %v2291
    %v2331 = vunpack.c.l.b16 %v2292
    %v2332 = vpack.c.b16 %v2317, %v2316
    %v2333 = vpack.c.b16 %v2319, %v2318
    %v2334 = vpack.c.b16 %v2321, %v2320
    %v2335 = vpack.c.b16 %v2323, %v2322
    %v2336 = vpack.c.b16 %v2325, %v2324
    %v2337 = vpack.c.b16 %v2327, %v2326
    %v2338 = vpack.c.b16 %v2329, %v2328
    %v2339 = vpack.c.b16 %v2331, %v2330
    %2348 = vmatprep.subr.bf16.mxu0 0
    %2349 = vmatpush1.bf16.msra.mxu0 %v2332
    %2350 = vmatprep.subr.bf16.mxu0 0
    %2351 = vmatpush1.bf16.msra.mxu0 %v2333
    %2352 = vmatprep.subr.bf16.mxu0 0
    %2353 = vmatpush1.bf16.msra.mxu0 %v2334
    %2354 = vmatprep.subr.bf16.mxu0 0
    %2355 = vmatpush1.bf16.msra.mxu0 %v2335
    %2356 = vmatprep.subr.bf16.mxu0 0
    %2357 = vmatpush1.bf16.msra.mxu0 %v2336
    %2358 = vmatprep.subr.bf16.mxu0 0
    %2359 = vmatpush1.bf16.msra.mxu0 %v2337
    %2360 = vmatprep.subr.bf16.mxu0 0
    %2361 = vmatpush1.bf16.msra.mxu0 %v2338
    %2362 = vmatprep.subr.bf16.mxu0 0
    %2363 = vmatpush1.bf16.msra.mxu0 %v2339
    %2364 = vmatprep.subr.bf16.mxu0 0
    %2365 = vmatpush1.bf16.msra.mxu0 0
    %2366 = vmatprep.subr.bf16.mxu0 0
    %2367 = vmatpush1.bf16.msra.mxu0 0
    %2368 = vmatprep.subr.bf16.mxu0 0
    %2369 = vmatpush1.bf16.msra.mxu0 0
    %2370 = vmatprep.subr.bf16.mxu0 0
    %2371 = vmatpush1.bf16.msra.mxu0 0
    %2372 = vmatprep.subr.bf16.mxu0 0
    %2373 = vmatpush1.bf16.msra.mxu0 0
    %2374 = vmatprep.subr.bf16.mxu0 0
    %2375 = vmatpush1.bf16.msra.mxu0 0
    %2376 = vmatprep.subr.bf16.mxu0 0
    %2377 = vmatpush1.bf16.msra.mxu0 0
    %2378 = vmatprep.subr.bf16.mxu0 0
    %2379 = vmatpush1.bf16.msra.mxu0 0
    %2380 = vmatprep.mubr.bf16.mxu0 0
    %2381 = vmatmul.mubr.bf16.gmra.mrb[0].mxu0 %v2275
    %v2382 = vpop.f32.mrb[0].mxu0
    %v2383 = vadd.f32 %v2298, %v2382
    %v2384 = vpop.f32.mrb[0].mxu0
    %v2385 = vpop.f32.mrb[0].mxu0
    %v2386 = vadd.f32 %v2298, %v2385
    %v2387 = vpop.f32.mrb[0].mxu0
    %2388 = vmatprep.mubr.bf16.mxu0 0
    %2389 = vmatmul.mubr.bf16.gmra.mrb[0].mxu0 %v2276
    %v2390 = vpop.f32.mrb[0].mxu0
    %v2391 = vadd.f32 %v2298, %v2390
    %v2392 = vpop.f32.mrb[0].mxu0
    %v2393 = vpop.f32.mrb[0].mxu0
    %v2394 = vadd.f32 %v2298, %v2393
    %v2395 = vpop.f32.mrb[0].mxu0
    %2396 = vdwg.mxu0
    %2397 = vst [vmem:[#allocation11] sm:$0xff] %v2383
    %2398 = vst [vmem:[#allocation11 + $0x8] sm:$0xff] %v2386
    %2399 = vst [vmem:[#allocation11 + $0x10] sm:$0xff] %v2391
    %2400 = vst [vmem:[#allocation11 + $0x18] sm:$0xff] %v2394
    // Predicated region
    $region58: #{tpu_custom_call.1} parent=1 // pred_check
      _
    $region59: #{tpu_custom_call.1} parent=1 // pred_check_branch
      %2402 = sbr.rel (0) target = $region61
    $region60: #{tpu_custom_call.1} parent=1 // pred_region
      %s2404 = ssub.s32 512, 512
      %2405 = vsyncadd [#allocation4], %s2404
      %s2406 = sshll.u32 [#allocation11], 4
      %s2407 = int_to_ptr.vmem [resolvable:$true] %s2406
      %2412 = dma.vmem_to_hbm [thread:$0]  %s2407, 512, %s9, [#allocation4], 128, 128, 8
    $region61: #{tpu_custom_call.1} parent=1 // pred_fallthru
      _
    // Predicated region
    $region62: #{tpu_custom_call.1} parent=1 // pred_check
      _
    $region63: #{tpu_custom_call.1} parent=1 // pred_check_branch
      %2414 = sbr.rel (0) target = $region65
    $region64: #{tpu_custom_call.1} parent=1 // pred_region
      %2415 = dma.done [#allocation4], 512
    $region65: #{tpu_custom_call.1} parent=1 // pred_fallthru
      _
    %2416 = vsyncpa [#allocation3], 1
    %2417 = vsyncpa [#allocation6], 1
    %2418 = vsyncpa [#allocation9], 1
    %2419 = vsyncpa [#allocation4], 1

</llo_original>
